<compile_context>
chip_gen: v5e
topology: v5e:2x2
jax: 0.10.0
libtpu: 0.0.40
codegen_flags: <defaults>
</compile_context>

<pallas_src>
import jax
import jax.numpy as jnp
from jax.experimental import pallas as pl
from jax.experimental.pallas import tpu as pltpu

HIDDEN = 128     # module default is 512; small hidden for the self-test
BATCH = 16

# ---- packed-parameter layout -------------------------------------------------
# w_big : (9, H, H) bf16 -- all HxH matmul weights (one resident VMEM slab)
IEW1, IEW2, TEW1, TEW2, WV, WO, GW1A, GW1B, GW2 = range(9)
# vecs  : (12, H) f32    -- all H-wide biases and LayerNorm gamma/beta
(V_IEB1, V_IEG, V_IEBT, V_IEB2,
 V_TEB1, V_TEG, V_TEBT, V_TEB2,
 V_BV, V_BO, V_GB1, V_GB2) = range(12)
# sm8   : (8, 28) f32    -- tiny-net weights with an 8-row (scal-width) input:
#           cols  0:16 quality-net layer1 (rows 0:4 real, rest zero)
#           cols 16:24 task-net    layer1 (rows 4:7 real, rest zero)
#           cols 24:26 quality-net layer3 (8 -> 2)
#           cols 26:28 task-net    layer2 (8 -> 2)
# qw2   : (16, 8) f32    -- quality-net layer2
# sbias : (1, 36) f32    -- [qb1(16) | tb1(8) | qb2(8) | qb3(2) | tb2(2)]


# ----------------------------------------------------------------------------
# shared math (used inside the Pallas kernel and as the pure-JAX reference).
# `w_big` only needs `[k]` indexing (Ref in-kernel, array outside), so each HxH
# weight is loaded at its use site.  vecs/sm8/qw2/sbias are small loaded arrays.
# ----------------------------------------------------------------------------
def _dot(x, w):
    # Cast activations to the weight dtype (bf16 for HxH weights) for native-rate
    # MXU; accumulate in f32.
    return jnp.dot(x.astype(w.dtype), w, preferred_element_type=jnp.float32)


def _softmax(x):
    m = jnp.max(x, axis=-1, keepdims=True)
    e = jnp.exp(x - m)
    return e / jnp.sum(e, axis=-1, keepdims=True)


def _enhancer(x, w_big, i_w1, i_w2, vecs, vb):
    # Linear -> LayerNorm -> ReLU -> Dropout(id) -> Linear; stats in f32.
    # vecs rows vb..vb+3 are [bias1, ln_gamma, ln_beta, bias2].
    h = _dot(x, w_big[i_w1]) + vecs[vb:vb + 1]
    mu = jnp.mean(h, axis=-1, keepdims=True)
    var = jnp.mean((h - mu) ** 2, axis=-1, keepdims=True)
    hn = (h - mu) * jax.lax.rsqrt(var + 1e-5) * vecs[vb + 1:vb + 2] + vecs[vb + 2:vb + 3]
    return _dot(jnp.maximum(hn, 0.0), w_big[i_w2]) + vecs[vb + 3:vb + 4]


def _mha_seqlen1(value, w_big, vecs):
    # MultiheadAttention with one key/query position == out_proj(v_proj(value)).
    v = _dot(value, w_big[WV]) + vecs[V_BV:V_BV + 1]
    return _dot(v, w_big[WO]) + vecs[V_BO:V_BO + 1]


def _forward_math(scal, img, text, eimg, etext, w_big, vecs, sm8, qw2, sbias):
    tb, h = img.shape
    shp = (tb, h)

    # Hoisted (TB,1)->(TB,H) broadcasts: each scalar column broadcast exactly once.
    def col(c):
        return jnp.broadcast_to(scal[:, c:c + 1], shp)

    r_img = col(4)     # img_task_relevance  (gates the mt==2 blend)
    r_text = col(5)    # text_task_relevance (gates the mt==1 blend)
    syn = col(6)
    mt = col(7)

    # ---- missing-type dependent input selection (mt is an exact 0/1/2 float) ---
    blend_t = jnp.where(r_text > 0.7, etext, r_text * etext + (1.0 - r_text) * text)
    cur_text = jnp.where(mt == 1.0, blend_t, text)
    blend_i = jnp.where(r_img > 0.7, eimg, r_img * eimg + (1.0 - r_img) * img)
    cur_img = jnp.where(mt == 2.0, blend_i, img)

    # ---- quality / task-relevance weight nets (fused first layer, lane-padded
    #      with zero rows so the whole 8-wide scal row can be fed -- exact) -----
    h_all = jnp.maximum(_dot(scal, sm8[:, 0:24]) + sbias[:, 0:24], 0.0)
    h_q2 = jnp.maximum(_dot(h_all[:, 0:16], qw2) + sbias[:, 24:32], 0.0)
    quality_w = _softmax(_dot(h_q2, sm8[:, 24:26]) + sbias[:, 32:34])       # [TB,2]
    task_w = _softmax(_dot(h_all[:, 16:24], sm8[:, 26:28]) + sbias[:, 34:36])

    # ---- quality guided enhancement --------------------------------------------
    img_strength = jnp.maximum(0.1, 1.0 - col(0))
    text_strength = jnp.maximum(0.1, 1.0 - col(1))
    img_enh = cur_img + img_strength * _enhancer(cur_img, w_big, IEW1, IEW2, vecs, V_IEB1)
    txt_enh = cur_text + text_strength * _enhancer(cur_text, w_big, TEW1, TEW2, vecs, V_TEB1)
    e_img = jnp.where(img_strength > 0.3, img_enh, cur_img)
    e_text = jnp.where(text_strength > 0.3, txt_enh, cur_text)

    # ---- cross-modal interaction: two shared-weight chains (no axis-0 concat) --
    img_att = _mha_seqlen1(e_text, w_big, vecs)   # query = img,  value = text
    txt_att = _mha_seqlen1(e_img, w_big, vecs)    # query = text, value = img
    hi_syn = syn > 0.5
    one_m_syn = 1.0 - syn
    e_img2 = jnp.where(hi_syn, syn * img_att + one_m_syn * e_img, e_img)
    e_text2 = jnp.where(hi_syn, syn * txt_att + one_m_syn * e_text, e_text)

    # ---- adaptive fusion: split-gw1 gate (no lane-axis concat) ------------------
    cw = 0.6 * quality_w + 0.4 * task_w
    wi = jnp.broadcast_to(cw[:, 0:1], shp) * e_img2
    wt = jnp.broadcast_to(cw[:, 1:2], shp) * e_text2
    g1 = jnp.maximum(_dot(wi, w_big[GW1A]) + _dot(wt, w_big[GW1B])
                     + vecs[V_GB1:V_GB1 + 1], 0.0)
    gate = jax.nn.sigmoid(_dot(g1, w_big[GW2]) + vecs[V_GB2:V_GB2 + 1])
    # fused = concat([gate*wi, (1-gate)*wt], -1); halves returned separately so the
    # kernel can do two direct lane-dense half-writes.
    return gate * wi, (1.0 - gate) * wt


# ----------------------------------------------------------------------------
# Pallas kernel
# ----------------------------------------------------------------------------
def fusion_kernel(scal_ref, img_ref, text_ref, eimg_ref, etext_ref,
                  w_big_ref, vecs_ref, sm8_ref, qw2_ref, sbias_ref, out_ref):
    h = img_ref.shape[-1]
    gated_img, gated_text = _forward_math(
        scal_ref[...], img_ref[...], text_ref[...], eimg_ref[...], etext_ref[...],
        w_big_ref,                 # sliced per-use inside (ref[k] loads one HxH)
        vecs_ref[...], sm8_ref[...], qw2_ref[...], sbias_ref[...])
    # Two direct half-writes; both halves are lane-dense (no (TB,2H) temporary).
    out_ref[:, :h] = gated_img.astype(out_ref.dtype)
    out_ref[:, h:] = gated_text.astype(out_ref.dtype)


def _maybe_vmem_limit(tb, h, params):
    """Only raise the scoped-VMEM limit when actually needed; generation-aware cap."""
    param_bytes = sum(int(p.nbytes) for p in params)          # resident, single copy
    stream_bytes = 2 * (tb * 8 * 4 + 4 * tb * h * 4 + tb * 2 * h * 4)  # double-buffered
    scratch_bytes = 16 * tb * h * 4                            # live intermediates
    need = param_bytes + stream_bytes + scratch_bytes
    default_scoped = 32 * 1024 * 1024
    if need <= default_scoped:
        return None                                            # keep compiler default
    try:
        phys = int(pltpu.get_tpu_info().vmem_capacity_bytes)
    except Exception:
        phys = 64 * 1024 * 1024                                # v7x-conservative fallback
    return min(need, (phys * 3) // 4)                          # leave compiler headroom


def quality_aware_fusion(scal, img, text, eimg, etext, params, *, block_batch=None):
    B, H = img.shape
    TB = B if block_batch is None else block_batch
    assert B % TB == 0, "batch must be a multiple of the batch tile"
    assert TB % 8 == 0, "batch tile must be a multiple of 8 (f32 sublane tile)"
    # For real H=512 pick TB as large as VMEM allows (multiple of 256 on v6e/v7x,
    # 128 on v5e); for this tiny test TB=B -> grid=(1,).
    grid = (B // TB,)

    feat_spec = pl.BlockSpec((TB, H), lambda i: (i, 0))
    scal_spec = pl.BlockSpec((TB, scal.shape[1]), lambda i: (i, 0))
    # Weights: whole-array VMEM operands -> resident, not double-buffered.
    weight_spec = pl.BlockSpec(memory_space=pltpu.MemorySpace.VMEM)
    out_spec = pl.BlockSpec((TB, 2 * H), lambda i: (i, 0))

    cp_kwargs = dict(dimension_semantics=("parallel",))        # megacore on v7x; inert on v5e/v6e
    vmem_limit = _maybe_vmem_limit(TB, H, params)
    if vmem_limit is not None:
        cp_kwargs["vmem_limit_bytes"] = int(vmem_limit)

    return pl.pallas_call(
        fusion_kernel,
        out_shape=jax.ShapeDtypeStruct((B, 2 * H), jnp.float32),
        grid=grid,
        in_specs=[scal_spec, feat_spec, feat_spec, feat_spec, feat_spec]
                 + [weight_spec] * len(params),
        out_specs=out_spec,
        compiler_params=pltpu.CompilerParams(**cp_kwargs),
    )(scal, img, text, eimg, etext, *params)


# ----------------------------------------------------------------------------
# deterministic parameter initialization (PyTorch Linear-style uniform init)
# ----------------------------------------------------------------------------
def init_params(key, H):
    def uni(k, shape, fin):
        bound = 1.0 / (fin ** 0.5)
        return jax.random.uniform(k, shape, jnp.float32, -bound, bound)

    def linear(k, fin, fout):
        kw, kb = jax.random.split(k)
        return uni(kw, (fin, fout), fin), uni(kb, (fout,), fin)

    ks = iter(jax.random.split(key, 16))

    # tiny quality net 4->16->8->2 and task-relevance net 3->8->2
    qw1, qb1 = linear(next(ks), 4, 16)
    qw2, qb2 = linear(next(ks), 16, 8)
    qw3, qb3 = linear(next(ks), 8, 2)
    tw1, tb1 = linear(next(ks), 3, 8)
    tw2, tb2 = linear(next(ks), 8, 2)

    sm8 = jnp.zeros((8, 28), jnp.float32)
    sm8 = sm8.at[0:4, 0:16].set(qw1)      # quality layer1 over scal cols 0..3
    sm8 = sm8.at[4:7, 16:24].set(tw1)     # task layer1 over scal cols 4..6
    sm8 = sm8.at[:, 24:26].set(qw3)
    sm8 = sm8.at[:, 26:28].set(tw2)
    sbias = jnp.concatenate([qb1, tb1, qb2, qb3, tb2])[None, :]      # (1, 36)

    # HxH weights (bf16, native MXU rate) and H-wide biases / LayerNorm (f32)
    iew1, ieb1 = linear(next(ks), H, H)
    iew2, ieb2 = linear(next(ks), H, H)
    tew1, teb1 = linear(next(ks), H, H)
    tew2, teb2 = linear(next(ks), H, H)
    wv, bv = linear(next(ks), H, H)            # MHA value projection
    wo, bo = linear(next(ks), H, H)            # MHA out_proj
    gw1, gb1 = linear(next(ks), 2 * H, H)      # adaptive_gate layer1 (2H->H), split below
    gw2, gb2 = linear(next(ks), H, H)

    w_big = jnp.stack([iew1, iew2, tew1, tew2, wv, wo,
                       gw1[:H], gw1[H:], gw2]).astype(jnp.bfloat16)  # (9, H, H)
    ln_g = jnp.ones((H,), jnp.float32)
    ln_b = jnp.zeros((H,), jnp.float32)
    vecs = jnp.stack([ieb1, ln_g, ln_b, ieb2,
                      teb1, ln_g, ln_b, teb2,
                      bv, bo, gb1, gb2])                             # (12, H)
    return (w_big, vecs, sm8, qw2, sbias)


if __name__ == "__main__":
    key = jax.random.PRNGKey(0)
    kp, kf = jax.random.split(key)
    params = init_params(kp, HIDDEN)

    k1, k2, k3, k4, k5 = jax.random.split(kf, 5)
    img = jax.random.normal(k1, (BATCH, HIDDEN), jnp.float32)
    text = jax.random.normal(k2, (BATCH, HIDDEN), jnp.float32)
    eimg = jax.random.normal(k3, (BATCH, HIDDEN), jnp.float32)
    etext = jax.random.normal(k4, (BATCH, HIDDEN), jnp.float32)

    # per-sample quality / task-relevance scalars in [0,1); missing_type in {0,1,2}
    qual = jax.random.uniform(k5, (BATCH, 7), jnp.float32)
    missing_type = jnp.tile(jnp.array([0.0, 1.0, 2.0, 1.0], jnp.float32),
                            BATCH // 4)[:, None]
    scal = jnp.concatenate([qual, missing_type], axis=-1)            # [B, 8]

    out = quality_aware_fusion(scal, img, text, eimg, etext, params)
    out = jax.block_until_ready(out)

    # pure-JAX reference (same math, same packed bf16/f32 params)
    gi_ref, gt_ref = _forward_math(scal, img, text, eimg, etext, *params)
    ref = jnp.concatenate([gi_ref, gt_ref], axis=-1)
    assert out.shape == (BATCH, 2 * HIDDEN)
    assert bool(jnp.isfinite(out).all())
    assert bool(jnp.allclose(out, ref, atol=2e-2, rtol=2e-2))

    print("KERNEL_OK")
</pallas_src>

<mosaic_0001>
module attributes {stable_mosaic.version = 11 : i64} {
  func.func @fusion_kernel(%arg0: i32, %arg1: memref<16x8xf32, #tpu.memory_space<vmem>>, %arg2: memref<16x128xf32, #tpu.memory_space<vmem>>, %arg3: memref<16x128xf32, #tpu.memory_space<vmem>>, %arg4: memref<16x128xf32, #tpu.memory_space<vmem>>, %arg5: memref<16x128xf32, #tpu.memory_space<vmem>>, %arg6: memref<9x128x128xbf16, #tpu.memory_space<vmem>>, %arg7: memref<12x128xf32, #tpu.memory_space<vmem>>, %arg8: memref<8x28xf32, #tpu.memory_space<vmem>>, %arg9: memref<16x8xf32, #tpu.memory_space<vmem>>, %arg10: memref<1x36xf32, #tpu.memory_space<vmem>>, %arg11: memref<16x256xf32, #tpu.memory_space<vmem>>) attributes {dimension_semantics = [#tpu.dimension_semantics<parallel>], iteration_bounds = array<i64: 1>, scalar_prefetch = 0 : i64, scratch_operands = 0 : i64, tpu.core_type = #tpu.core_type<tc>, window_params = [{transform_indices = @transform_0, window_bounds = array<i64: 16, 8>}, {transform_indices = @transform_1, window_bounds = array<i64: 16, 128>}, {transform_indices = @transform_2, window_bounds = array<i64: 16, 128>}, {transform_indices = @transform_3, window_bounds = array<i64: 16, 128>}, {transform_indices = @transform_4, window_bounds = array<i64: 16, 128>}, {pipeline_mode = #tpu.pipeline_mode<synchronous>, transform_indices = @transform_5, window_bounds = array<i64: 9, 128, 128>}, {pipeline_mode = #tpu.pipeline_mode<synchronous>, transform_indices = @transform_6, window_bounds = array<i64: 12, 128>}, {pipeline_mode = #tpu.pipeline_mode<synchronous>, transform_indices = @transform_7, window_bounds = array<i64: 8, 28>}, {pipeline_mode = #tpu.pipeline_mode<synchronous>, transform_indices = @transform_8, window_bounds = array<i64: 16, 8>}, {pipeline_mode = #tpu.pipeline_mode<synchronous>, transform_indices = @transform_9, window_bounds = array<i64: 1, 36>}, {transform_indices = @transform_10, window_bounds = array<i64: 16, 256>}]} {
    %c0 = arith.constant 0 : index
    %c0_0 = arith.constant 0 : index
    %0 = vector.load %arg1[%c0, %c0_0] : memref<16x8xf32, #tpu.memory_space<vmem>>, vector<16x8xf32>
    %c0_1 = arith.constant 0 : index
    %c0_2 = arith.constant 0 : index
    %1 = vector.load %arg2[%c0_1, %c0_2] : memref<16x128xf32, #tpu.memory_space<vmem>>, vector<16x128xf32>
    %c0_3 = arith.constant 0 : index
    %c0_4 = arith.constant 0 : index
    %2 = vector.load %arg3[%c0_3, %c0_4] : memref<16x128xf32, #tpu.memory_space<vmem>>, vector<16x128xf32>
    %c0_5 = arith.constant 0 : index
    %c0_6 = arith.constant 0 : index
    %3 = vector.load %arg4[%c0_5, %c0_6] : memref<16x128xf32, #tpu.memory_space<vmem>>, vector<16x128xf32>
    %c0_7 = arith.constant 0 : index
    %c0_8 = arith.constant 0 : index
    %4 = vector.load %arg5[%c0_7, %c0_8] : memref<16x128xf32, #tpu.memory_space<vmem>>, vector<16x128xf32>
    %c0_9 = arith.constant 0 : index
    %c0_10 = arith.constant 0 : index
    %5 = vector.load %arg7[%c0_9, %c0_10] : memref<12x128xf32, #tpu.memory_space<vmem>>, vector<12x128xf32>
    %c0_11 = arith.constant 0 : index
    %c0_12 = arith.constant 0 : index
    %6 = vector.load %arg8[%c0_11, %c0_12] : memref<8x28xf32, #tpu.memory_space<vmem>>, vector<8x28xf32>
    %c0_13 = arith.constant 0 : index
    %c0_14 = arith.constant 0 : index
    %7 = vector.load %arg9[%c0_13, %c0_14] : memref<16x8xf32, #tpu.memory_space<vmem>>, vector<16x8xf32>
    %c0_15 = arith.constant 0 : index
    %c0_16 = arith.constant 0 : index
    %8 = vector.load %arg10[%c0_15, %c0_16] : memref<1x36xf32, #tpu.memory_space<vmem>>, vector<1x36xf32>
    %9 = vector.extract_strided_slice %0 {offsets = [0, 4], sizes = [16, 1], strides = [1, 1]} : vector<16x8xf32> to vector<16x1xf32>
    %10 = vector.shape_cast %9 : vector<16x1xf32> to vector<16x1xf32>
    %11 = vector.broadcast %10 : vector<16x1xf32> to vector<16x128xf32>
    %12 = vector.extract_strided_slice %0 {offsets = [0, 5], sizes = [16, 1], strides = [1, 1]} : vector<16x8xf32> to vector<16x1xf32>
    %13 = vector.shape_cast %12 : vector<16x1xf32> to vector<16x1xf32>
    %14 = vector.broadcast %13 : vector<16x1xf32> to vector<16x128xf32>
    %15 = vector.extract_strided_slice %0 {offsets = [0, 6], sizes = [16, 1], strides = [1, 1]} : vector<16x8xf32> to vector<16x1xf32>
    %16 = vector.shape_cast %15 : vector<16x1xf32> to vector<16x1xf32>
    %17 = vector.broadcast %16 : vector<16x1xf32> to vector<16x128xf32>
    %18 = vector.extract_strided_slice %0 {offsets = [0, 7], sizes = [16, 1], strides = [1, 1]} : vector<16x8xf32> to vector<16x1xf32>
    %19 = vector.shape_cast %18 : vector<16x1xf32> to vector<16x1xf32>
    %20 = vector.broadcast %19 : vector<16x1xf32> to vector<16x128xf32>
    %cst = arith.constant 0.699999988 : f32
    %21 = vector.broadcast %cst : f32 to vector<16x128xf32>
    %22 = arith.cmpf ogt, %14, %21 : vector<16x128xf32>
    %23 = arith.mulf %14, %4 : vector<16x128xf32>
    %cst_17 = arith.constant 1.000000e+00 : f32
    %24 = vector.broadcast %cst_17 : f32 to vector<16x128xf32>
    %25 = arith.subf %24, %14 : vector<16x128xf32>
    %26 = arith.mulf %25, %2 : vector<16x128xf32>
    %27 = arith.addf %23, %26 : vector<16x128xf32>
    %28 = arith.select %22, %4, %27 : vector<16x128xi1>, vector<16x128xf32>
    %cst_18 = arith.constant 1.000000e+00 : f32
    %29 = vector.broadcast %cst_18 : f32 to vector<16x128xf32>
    %30 = arith.cmpf oeq, %20, %29 : vector<16x128xf32>
    %31 = arith.select %30, %28, %2 : vector<16x128xi1>, vector<16x128xf32>
    %cst_19 = arith.constant 0.699999988 : f32
    %32 = vector.broadcast %cst_19 : f32 to vector<16x128xf32>
    %33 = arith.cmpf ogt, %11, %32 : vector<16x128xf32>
    %34 = arith.mulf %11, %3 : vector<16x128xf32>
    %cst_20 = arith.constant 1.000000e+00 : f32
    %35 = vector.broadcast %cst_20 : f32 to vector<16x128xf32>
    %36 = arith.subf %35, %11 : vector<16x128xf32>
    %37 = arith.mulf %36, %1 : vector<16x128xf32>
    %38 = arith.addf %34, %37 : vector<16x128xf32>
    %39 = arith.select %33, %3, %38 : vector<16x128xi1>, vector<16x128xf32>
    %cst_21 = arith.constant 2.000000e+00 : f32
    %40 = vector.broadcast %cst_21 : f32 to vector<16x128xf32>
    %41 = arith.cmpf oeq, %20, %40 : vector<16x128xf32>
    %42 = arith.select %41, %39, %1 : vector<16x128xi1>, vector<16x128xf32>
    %43 = vector.extract_strided_slice %6 {offsets = [0, 0], sizes = [8, 24], strides = [1, 1]} : vector<8x28xf32> to vector<8x24xf32>
    %cst_22 = arith.constant dense<0.000000e+00> : vector<16x24xf32>
    %44 = tpu.matmul %0, %43, %cst_22 {dimension_numbers = #tpu.dot_dimension_numbers<[1], [0], [0], [1], [0, 0, 1, 1], [], []>} : vector<16x8xf32>, vector<8x24xf32>, vector<16x24xf32> -> vector<16x24xf32>
    %45 = vector.extract_strided_slice %8 {offsets = [0, 0], sizes = [1, 24], strides = [1, 1]} : vector<1x36xf32> to vector<1x24xf32>
    %46 = vector.broadcast %45 : vector<1x24xf32> to vector<16x24xf32>
    %47 = arith.addf %44, %46 : vector<16x24xf32>
    %cst_23 = arith.constant 0.000000e+00 : f32
    %48 = vector.broadcast %cst_23 : f32 to vector<16x24xf32>
    %49 = arith.maximumf %47, %48 : vector<16x24xf32>
    %50 = vector.extract_strided_slice %49 {offsets = [0, 0], sizes = [16, 16], strides = [1, 1]} : vector<16x24xf32> to vector<16x16xf32>
    %cst_24 = arith.constant dense<0.000000e+00> : vector<16x8xf32>
    %51 = tpu.matmul %50, %7, %cst_24 {dimension_numbers = #tpu.dot_dimension_numbers<[1], [0], [0], [1], [0, 0, 1, 1], [], []>} : vector<16x16xf32>, vector<16x8xf32>, vector<16x8xf32> -> vector<16x8xf32>
    %52 = vector.extract_strided_slice %8 {offsets = [0, 24], sizes = [1, 8], strides = [1, 1]} : vector<1x36xf32> to vector<1x8xf32>
    %53 = vector.broadcast %52 : vector<1x8xf32> to vector<16x8xf32>
    %54 = arith.addf %51, %53 : vector<16x8xf32>
    %cst_25 = arith.constant 0.000000e+00 : f32
    %55 = vector.broadcast %cst_25 : f32 to vector<16x8xf32>
    %56 = arith.maximumf %54, %55 : vector<16x8xf32>
    %57 = vector.extract_strided_slice %6 {offsets = [0, 24], sizes = [8, 2], strides = [1, 1]} : vector<8x28xf32> to vector<8x2xf32>
    %cst_26 = arith.constant dense<0.000000e+00> : vector<16x2xf32>
    %58 = tpu.matmul %56, %57, %cst_26 {dimension_numbers = #tpu.dot_dimension_numbers<[1], [0], [0], [1], [0, 0, 1, 1], [], []>} : vector<16x8xf32>, vector<8x2xf32>, vector<16x2xf32> -> vector<16x2xf32>
    %59 = vector.extract_strided_slice %8 {offsets = [0, 32], sizes = [1, 2], strides = [1, 1]} : vector<1x36xf32> to vector<1x2xf32>
    %60 = vector.broadcast %59 : vector<1x2xf32> to vector<16x2xf32>
    %61 = arith.addf %58, %60 : vector<16x2xf32>
    %cst_27 = arith.constant dense<0xFF800000> : vector<16xf32>
    %62 = vector.multi_reduction <maximumf>, %61, %cst_27 [1] : vector<16x2xf32> to vector<16xf32>
    %63 = vector.shape_cast %62 : vector<16xf32> to vector<16x1xf32>
    %64 = vector.broadcast %63 : vector<16x1xf32> to vector<16x2xf32>
    %65 = arith.subf %61, %64 : vector<16x2xf32>
    %66 = math.exp %65 : vector<16x2xf32>
    %cst_28 = arith.constant dense<0.000000e+00> : vector<16xf32>
    %67 = vector.multi_reduction <add>, %66, %cst_28 [1] : vector<16x2xf32> to vector<16xf32>
    %68 = vector.shape_cast %67 : vector<16xf32> to vector<16x1xf32>
    %69 = vector.broadcast %68 : vector<16x1xf32> to vector<16x2xf32>
    %70 = arith.divf %66, %69 : vector<16x2xf32>
    %71 = vector.extract_strided_slice %49 {offsets = [0, 16], sizes = [16, 8], strides = [1, 1]} : vector<16x24xf32> to vector<16x8xf32>
    %72 = vector.extract_strided_slice %6 {offsets = [0, 26], sizes = [8, 2], strides = [1, 1]} : vector<8x28xf32> to vector<8x2xf32>
    %cst_29 = arith.constant dense<0.000000e+00> : vector<16x2xf32>
    %73 = tpu.matmul %71, %72, %cst_29 {dimension_numbers = #tpu.dot_dimension_numbers<[1], [0], [0], [1], [0, 0, 1, 1], [], []>} : vector<16x8xf32>, vector<8x2xf32>, vector<16x2xf32> -> vector<16x2xf32>
    %74 = vector.extract_strided_slice %8 {offsets = [0, 34], sizes = [1, 2], strides = [1, 1]} : vector<1x36xf32> to vector<1x2xf32>
    %75 = vector.broadcast %74 : vector<1x2xf32> to vector<16x2xf32>
    %76 = arith.addf %73, %75 : vector<16x2xf32>
    %cst_30 = arith.constant dense<0xFF800000> : vector<16xf32>
    %77 = vector.multi_reduction <maximumf>, %76, %cst_30 [1] : vector<16x2xf32> to vector<16xf32>
    %78 = vector.shape_cast %77 : vector<16xf32> to vector<16x1xf32>
    %79 = vector.broadcast %78 : vector<16x1xf32> to vector<16x2xf32>
    %80 = arith.subf %76, %79 : vector<16x2xf32>
    %81 = math.exp %80 : vector<16x2xf32>
    %cst_31 = arith.constant dense<0.000000e+00> : vector<16xf32>
    %82 = vector.multi_reduction <add>, %81, %cst_31 [1] : vector<16x2xf32> to vector<16xf32>
    %83 = vector.shape_cast %82 : vector<16xf32> to vector<16x1xf32>
    %84 = vector.broadcast %83 : vector<16x1xf32> to vector<16x2xf32>
    %85 = arith.divf %81, %84 : vector<16x2xf32>
    %86 = vector.extract_strided_slice %0 {offsets = [0, 0], sizes = [16, 1], strides = [1, 1]} : vector<16x8xf32> to vector<16x1xf32>
    %87 = vector.shape_cast %86 : vector<16x1xf32> to vector<16x1xf32>
    %88 = vector.broadcast %87 : vector<16x1xf32> to vector<16x128xf32>
    %cst_32 = arith.constant 1.000000e+00 : f32
    %89 = vector.broadcast %cst_32 : f32 to vector<16x128xf32>
    %90 = arith.subf %89, %88 : vector<16x128xf32>
    %cst_33 = arith.constant 1.000000e-01 : f32
    %91 = vector.broadcast %cst_33 : f32 to vector<16x128xf32>
    %92 = arith.maximumf %91, %90 : vector<16x128xf32>
    %93 = vector.extract_strided_slice %0 {offsets = [0, 1], sizes = [16, 1], strides = [1, 1]} : vector<16x8xf32> to vector<16x1xf32>
    %94 = vector.shape_cast %93 : vector<16x1xf32> to vector<16x1xf32>
    %95 = vector.broadcast %94 : vector<16x1xf32> to vector<16x128xf32>
    %cst_34 = arith.constant 1.000000e+00 : f32
    %96 = vector.broadcast %cst_34 : f32 to vector<16x128xf32>
    %97 = arith.subf %96, %95 : vector<16x128xf32>
    %cst_35 = arith.constant 1.000000e-01 : f32
    %98 = vector.broadcast %cst_35 : f32 to vector<16x128xf32>
    %99 = arith.maximumf %98, %97 : vector<16x128xf32>
    %c0_36 = arith.constant 0 : index
    %c0_37 = arith.constant 0 : index
    %c0_38 = arith.constant 0 : index
    %100 = vector.load %arg6[%c0_36, %c0_37, %c0_38] : memref<9x128x128xbf16, #tpu.memory_space<vmem>>, vector<1x128x128xbf16>
    %101 = vector.shape_cast %100 : vector<1x128x128xbf16> to vector<128x128xbf16>
    %102 = arith.truncf %42 : vector<16x128xf32> to vector<16x128xbf16>
    %cst_39 = arith.constant dense<0.000000e+00> : vector<16x128xf32>
    %103 = tpu.matmul %102, %101, %cst_39 {dimension_numbers = #tpu.dot_dimension_numbers<[1], [0], [0], [1], [0, 0, 1, 1], [], []>} : vector<16x128xbf16>, vector<128x128xbf16>, vector<16x128xf32> -> vector<16x128xf32>
    %104 = vector.extract_strided_slice %5 {offsets = [0, 0], sizes = [1, 128], strides = [1, 1]} : vector<12x128xf32> to vector<1x128xf32>
    %105 = vector.broadcast %104 : vector<1x128xf32> to vector<16x128xf32>
    %106 = arith.addf %103, %105 : vector<16x128xf32>
    %cst_40 = arith.constant dense<0.000000e+00> : vector<16xf32>
    %107 = vector.multi_reduction <add>, %106, %cst_40 [1] : vector<16x128xf32> to vector<16xf32>
    %108 = vector.shape_cast %107 : vector<16xf32> to vector<16x1xf32>
    %cst_41 = arith.constant 1.280000e+02 : f32
    %109 = vector.broadcast %cst_41 : f32 to vector<16x1xf32>
    %110 = arith.divf %108, %109 : vector<16x1xf32>
    %111 = vector.broadcast %110 : vector<16x1xf32> to vector<16x128xf32>
    %112 = arith.subf %106, %111 : vector<16x128xf32>
    %113 = arith.mulf %112, %112 : vector<16x128xf32>
    %cst_42 = arith.constant dense<0.000000e+00> : vector<16xf32>
    %114 = vector.multi_reduction <add>, %113, %cst_42 [1] : vector<16x128xf32> to vector<16xf32>
    %115 = vector.shape_cast %114 : vector<16xf32> to vector<16x1xf32>
    %cst_43 = arith.constant 1.280000e+02 : f32
    %116 = vector.broadcast %cst_43 : f32 to vector<16x1xf32>
    %117 = arith.divf %115, %116 : vector<16x1xf32>
    %118 = vector.broadcast %110 : vector<16x1xf32> to vector<16x128xf32>
    %119 = arith.subf %106, %118 : vector<16x128xf32>
    %cst_44 = arith.constant 9.99999974E-6 : f32
    %120 = vector.broadcast %cst_44 : f32 to vector<16x1xf32>
    %121 = arith.addf %117, %120 : vector<16x1xf32>
    %122 = math.rsqrt %121 : vector<16x1xf32>
    %123 = vector.broadcast %122 : vector<16x1xf32> to vector<16x128xf32>
    %124 = arith.mulf %119, %123 : vector<16x128xf32>
    %125 = vector.extract_strided_slice %5 {offsets = [1, 0], sizes = [1, 128], strides = [1, 1]} : vector<12x128xf32> to vector<1x128xf32>
    %126 = vector.broadcast %125 : vector<1x128xf32> to vector<16x128xf32>
    %127 = arith.mulf %124, %126 : vector<16x128xf32>
    %128 = vector.extract_strided_slice %5 {offsets = [2, 0], sizes = [1, 128], strides = [1, 1]} : vector<12x128xf32> to vector<1x128xf32>
    %129 = vector.broadcast %128 : vector<1x128xf32> to vector<16x128xf32>
    %130 = arith.addf %127, %129 : vector<16x128xf32>
    %cst_45 = arith.constant 0.000000e+00 : f32
    %131 = vector.broadcast %cst_45 : f32 to vector<16x128xf32>
    %132 = arith.maximumf %130, %131 : vector<16x128xf32>
    %c1 = arith.constant 1 : index
    %c0_46 = arith.constant 0 : index
    %c0_47 = arith.constant 0 : index
    %133 = vector.load %arg6[%c1, %c0_46, %c0_47] : memref<9x128x128xbf16, #tpu.memory_space<vmem>>, vector<1x128x128xbf16>
    %134 = vector.shape_cast %133 : vector<1x128x128xbf16> to vector<128x128xbf16>
    %135 = arith.truncf %132 : vector<16x128xf32> to vector<16x128xbf16>
    %cst_48 = arith.constant dense<0.000000e+00> : vector<16x128xf32>
    %136 = tpu.matmul %135, %134, %cst_48 {dimension_numbers = #tpu.dot_dimension_numbers<[1], [0], [0], [1], [0, 0, 1, 1], [], []>} : vector<16x128xbf16>, vector<128x128xbf16>, vector<16x128xf32> -> vector<16x128xf32>
    %137 = vector.extract_strided_slice %5 {offsets = [3, 0], sizes = [1, 128], strides = [1, 1]} : vector<12x128xf32> to vector<1x128xf32>
    %138 = vector.broadcast %137 : vector<1x128xf32> to vector<16x128xf32>
    %139 = arith.addf %136, %138 : vector<16x128xf32>
    %140 = arith.mulf %92, %139 : vector<16x128xf32>
    %141 = arith.addf %42, %140 : vector<16x128xf32>
    %c2 = arith.constant 2 : index
    %c0_49 = arith.constant 0 : index
    %c0_50 = arith.constant 0 : index
    %142 = vector.load %arg6[%c2, %c0_49, %c0_50] : memref<9x128x128xbf16, #tpu.memory_space<vmem>>, vector<1x128x128xbf16>
    %143 = vector.shape_cast %142 : vector<1x128x128xbf16> to vector<128x128xbf16>
    %144 = arith.truncf %31 : vector<16x128xf32> to vector<16x128xbf16>
    %cst_51 = arith.constant dense<0.000000e+00> : vector<16x128xf32>
    %145 = tpu.matmul %144, %143, %cst_51 {dimension_numbers = #tpu.dot_dimension_numbers<[1], [0], [0], [1], [0, 0, 1, 1], [], []>} : vector<16x128xbf16>, vector<128x128xbf16>, vector<16x128xf32> -> vector<16x128xf32>
    %146 = vector.extract_strided_slice %5 {offsets = [4, 0], sizes = [1, 128], strides = [1, 1]} : vector<12x128xf32> to vector<1x128xf32>
    %147 = vector.broadcast %146 : vector<1x128xf32> to vector<16x128xf32>
    %148 = arith.addf %145, %147 : vector<16x128xf32>
    %cst_52 = arith.constant dense<0.000000e+00> : vector<16xf32>
    %149 = vector.multi_reduction <add>, %148, %cst_52 [1] : vector<16x128xf32> to vector<16xf32>
    %150 = vector.shape_cast %149 : vector<16xf32> to vector<16x1xf32>
    %cst_53 = arith.constant 1.280000e+02 : f32
    %151 = vector.broadcast %cst_53 : f32 to vector<16x1xf32>
    %152 = arith.divf %150, %151 : vector<16x1xf32>
    %153 = vector.broadcast %152 : vector<16x1xf32> to vector<16x128xf32>
    %154 = arith.subf %148, %153 : vector<16x128xf32>
    %155 = arith.mulf %154, %154 : vector<16x128xf32>
    %cst_54 = arith.constant dense<0.000000e+00> : vector<16xf32>
    %156 = vector.multi_reduction <add>, %155, %cst_54 [1] : vector<16x128xf32> to vector<16xf32>
    %157 = vector.shape_cast %156 : vector<16xf32> to vector<16x1xf32>
    %cst_55 = arith.constant 1.280000e+02 : f32
    %158 = vector.broadcast %cst_55 : f32 to vector<16x1xf32>
    %159 = arith.divf %157, %158 : vector<16x1xf32>
    %160 = vector.broadcast %152 : vector<16x1xf32> to vector<16x128xf32>
    %161 = arith.subf %148, %160 : vector<16x128xf32>
    %cst_56 = arith.constant 9.99999974E-6 : f32
    %162 = vector.broadcast %cst_56 : f32 to vector<16x1xf32>
    %163 = arith.addf %159, %162 : vector<16x1xf32>
    %164 = math.rsqrt %163 : vector<16x1xf32>
    %165 = vector.broadcast %164 : vector<16x1xf32> to vector<16x128xf32>
    %166 = arith.mulf %161, %165 : vector<16x128xf32>
    %167 = vector.extract_strided_slice %5 {offsets = [5, 0], sizes = [1, 128], strides = [1, 1]} : vector<12x128xf32> to vector<1x128xf32>
    %168 = vector.broadcast %167 : vector<1x128xf32> to vector<16x128xf32>
    %169 = arith.mulf %166, %168 : vector<16x128xf32>
    %170 = vector.extract_strided_slice %5 {offsets = [6, 0], sizes = [1, 128], strides = [1, 1]} : vector<12x128xf32> to vector<1x128xf32>
    %171 = vector.broadcast %170 : vector<1x128xf32> to vector<16x128xf32>
    %172 = arith.addf %169, %171 : vector<16x128xf32>
    %cst_57 = arith.constant 0.000000e+00 : f32
    %173 = vector.broadcast %cst_57 : f32 to vector<16x128xf32>
    %174 = arith.maximumf %172, %173 : vector<16x128xf32>
    %c3 = arith.constant 3 : index
    %c0_58 = arith.constant 0 : index
    %c0_59 = arith.constant 0 : index
    %175 = vector.load %arg6[%c3, %c0_58, %c0_59] : memref<9x128x128xbf16, #tpu.memory_space<vmem>>, vector<1x128x128xbf16>
    %176 = vector.shape_cast %175 : vector<1x128x128xbf16> to vector<128x128xbf16>
    %177 = arith.truncf %174 : vector<16x128xf32> to vector<16x128xbf16>
    %cst_60 = arith.constant dense<0.000000e+00> : vector<16x128xf32>
    %178 = tpu.matmul %177, %176, %cst_60 {dimension_numbers = #tpu.dot_dimension_numbers<[1], [0], [0], [1], [0, 0, 1, 1], [], []>} : vector<16x128xbf16>, vector<128x128xbf16>, vector<16x128xf32> -> vector<16x128xf32>
    %179 = vector.extract_strided_slice %5 {offsets = [7, 0], sizes = [1, 128], strides = [1, 1]} : vector<12x128xf32> to vector<1x128xf32>
    %180 = vector.broadcast %179 : vector<1x128xf32> to vector<16x128xf32>
    %181 = arith.addf %178, %180 : vector<16x128xf32>
    %182 = arith.mulf %99, %181 : vector<16x128xf32>
    %183 = arith.addf %31, %182 : vector<16x128xf32>
    %cst_61 = arith.constant 3.000000e-01 : f32
    %184 = vector.broadcast %cst_61 : f32 to vector<16x128xf32>
    %185 = arith.cmpf ogt, %92, %184 : vector<16x128xf32>
    %186 = arith.select %185, %141, %42 : vector<16x128xi1>, vector<16x128xf32>
    %cst_62 = arith.constant 3.000000e-01 : f32
    %187 = vector.broadcast %cst_62 : f32 to vector<16x128xf32>
    %188 = arith.cmpf ogt, %99, %187 : vector<16x128xf32>
    %189 = arith.select %188, %183, %31 : vector<16x128xi1>, vector<16x128xf32>
    %c4 = arith.constant 4 : index
    %c0_63 = arith.constant 0 : index
    %c0_64 = arith.constant 0 : index
    %190 = vector.load %arg6[%c4, %c0_63, %c0_64] : memref<9x128x128xbf16, #tpu.memory_space<vmem>>, vector<1x128x128xbf16>
    %191 = vector.shape_cast %190 : vector<1x128x128xbf16> to vector<128x128xbf16>
    %192 = arith.truncf %189 : vector<16x128xf32> to vector<16x128xbf16>
    %cst_65 = arith.constant dense<0.000000e+00> : vector<16x128xf32>
    %193 = tpu.matmul %192, %191, %cst_65 {dimension_numbers = #tpu.dot_dimension_numbers<[1], [0], [0], [1], [0, 0, 1, 1], [], []>} : vector<16x128xbf16>, vector<128x128xbf16>, vector<16x128xf32> -> vector<16x128xf32>
    %194 = vector.extract_strided_slice %5 {offsets = [8, 0], sizes = [1, 128], strides = [1, 1]} : vector<12x128xf32> to vector<1x128xf32>
    %195 = vector.broadcast %194 : vector<1x128xf32> to vector<16x128xf32>
    %196 = arith.addf %193, %195 : vector<16x128xf32>
    %c5 = arith.constant 5 : index
    %c0_66 = arith.constant 0 : index
    %c0_67 = arith.constant 0 : index
    %197 = vector.load %arg6[%c5, %c0_66, %c0_67] : memref<9x128x128xbf16, #tpu.memory_space<vmem>>, vector<1x128x128xbf16>
    %198 = vector.shape_cast %197 : vector<1x128x128xbf16> to vector<128x128xbf16>
    %199 = arith.truncf %196 : vector<16x128xf32> to vector<16x128xbf16>
    %cst_68 = arith.constant dense<0.000000e+00> : vector<16x128xf32>
    %200 = tpu.matmul %199, %198, %cst_68 {dimension_numbers = #tpu.dot_dimension_numbers<[1], [0], [0], [1], [0, 0, 1, 1], [], []>} : vector<16x128xbf16>, vector<128x128xbf16>, vector<16x128xf32> -> vector<16x128xf32>
    %201 = vector.extract_strided_slice %5 {offsets = [9, 0], sizes = [1, 128], strides = [1, 1]} : vector<12x128xf32> to vector<1x128xf32>
    %202 = vector.broadcast %201 : vector<1x128xf32> to vector<16x128xf32>
    %203 = arith.addf %200, %202 : vector<16x128xf32>
    %c4_69 = arith.constant 4 : index
    %c0_70 = arith.constant 0 : index
    %c0_71 = arith.constant 0 : index
    %204 = vector.load %arg6[%c4_69, %c0_70, %c0_71] : memref<9x128x128xbf16, #tpu.memory_space<vmem>>, vector<1x128x128xbf16>
    %205 = vector.shape_cast %204 : vector<1x128x128xbf16> to vector<128x128xbf16>
    %206 = arith.truncf %186 : vector<16x128xf32> to vector<16x128xbf16>
    %cst_72 = arith.constant dense<0.000000e+00> : vector<16x128xf32>
    %207 = tpu.matmul %206, %205, %cst_72 {dimension_numbers = #tpu.dot_dimension_numbers<[1], [0], [0], [1], [0, 0, 1, 1], [], []>} : vector<16x128xbf16>, vector<128x128xbf16>, vector<16x128xf32> -> vector<16x128xf32>
    %208 = vector.extract_strided_slice %5 {offsets = [8, 0], sizes = [1, 128], strides = [1, 1]} : vector<12x128xf32> to vector<1x128xf32>
    %209 = vector.broadcast %208 : vector<1x128xf32> to vector<16x128xf32>
    %210 = arith.addf %207, %209 : vector<16x128xf32>
    %c5_73 = arith.constant 5 : index
    %c0_74 = arith.constant 0 : index
    %c0_75 = arith.constant 0 : index
    %211 = vector.load %arg6[%c5_73, %c0_74, %c0_75] : memref<9x128x128xbf16, #tpu.memory_space<vmem>>, vector<1x128x128xbf16>
    %212 = vector.shape_cast %211 : vector<1x128x128xbf16> to vector<128x128xbf16>
    %213 = arith.truncf %210 : vector<16x128xf32> to vector<16x128xbf16>
    %cst_76 = arith.constant dense<0.000000e+00> : vector<16x128xf32>
    %214 = tpu.matmul %213, %212, %cst_76 {dimension_numbers = #tpu.dot_dimension_numbers<[1], [0], [0], [1], [0, 0, 1, 1], [], []>} : vector<16x128xbf16>, vector<128x128xbf16>, vector<16x128xf32> -> vector<16x128xf32>
    %215 = vector.extract_strided_slice %5 {offsets = [9, 0], sizes = [1, 128], strides = [1, 1]} : vector<12x128xf32> to vector<1x128xf32>
    %216 = vector.broadcast %215 : vector<1x128xf32> to vector<16x128xf32>
    %217 = arith.addf %214, %216 : vector<16x128xf32>
    %cst_77 = arith.constant 5.000000e-01 : f32
    %218 = vector.broadcast %cst_77 : f32 to vector<16x128xf32>
    %219 = arith.cmpf ogt, %17, %218 : vector<16x128xf32>
    %cst_78 = arith.constant 1.000000e+00 : f32
    %220 = vector.broadcast %cst_78 : f32 to vector<16x128xf32>
    %221 = arith.subf %220, %17 : vector<16x128xf32>
    %222 = arith.mulf %17, %203 : vector<16x128xf32>
    %223 = arith.mulf %221, %186 : vector<16x128xf32>
    %224 = arith.addf %222, %223 : vector<16x128xf32>
    %225 = arith.select %219, %224, %186 : vector<16x128xi1>, vector<16x128xf32>
    %226 = arith.mulf %17, %217 : vector<16x128xf32>
    %227 = arith.mulf %221, %189 : vector<16x128xf32>
    %228 = arith.addf %226, %227 : vector<16x128xf32>
    %229 = arith.select %219, %228, %189 : vector<16x128xi1>, vector<16x128xf32>
    %cst_79 = arith.constant 6.000000e-01 : f32
    %230 = vector.broadcast %cst_79 : f32 to vector<16x2xf32>
    %231 = arith.mulf %230, %70 : vector<16x2xf32>
    %cst_80 = arith.constant 4.000000e-01 : f32
    %232 = vector.broadcast %cst_80 : f32 to vector<16x2xf32>
    %233 = arith.mulf %232, %85 : vector<16x2xf32>
    %234 = arith.addf %231, %233 : vector<16x2xf32>
    %235 = vector.extract_strided_slice %234 {offsets = [0, 0], sizes = [16, 1], strides = [1, 1]} : vector<16x2xf32> to vector<16x1xf32>
    %236 = vector.shape_cast %235 : vector<16x1xf32> to vector<16x1xf32>
    %237 = vector.broadcast %236 : vector<16x1xf32> to vector<16x128xf32>
    %238 = arith.mulf %237, %225 : vector<16x128xf32>
    %239 = vector.extract_strided_slice %234 {offsets = [0, 1], sizes = [16, 1], strides = [1, 1]} : vector<16x2xf32> to vector<16x1xf32>
    %240 = vector.shape_cast %239 : vector<16x1xf32> to vector<16x1xf32>
    %241 = vector.broadcast %240 : vector<16x1xf32> to vector<16x128xf32>
    %242 = arith.mulf %241, %229 : vector<16x128xf32>
    %c6 = arith.constant 6 : index
    %c0_81 = arith.constant 0 : index
    %c0_82 = arith.constant 0 : index
    %243 = vector.load %arg6[%c6, %c0_81, %c0_82] : memref<9x128x128xbf16, #tpu.memory_space<vmem>>, vector<1x128x128xbf16>
    %244 = vector.shape_cast %243 : vector<1x128x128xbf16> to vector<128x128xbf16>
    %245 = arith.truncf %238 : vector<16x128xf32> to vector<16x128xbf16>
    %cst_83 = arith.constant dense<0.000000e+00> : vector<16x128xf32>
    %246 = tpu.matmul %245, %244, %cst_83 {dimension_numbers = #tpu.dot_dimension_numbers<[1], [0], [0], [1], [0, 0, 1, 1], [], []>} : vector<16x128xbf16>, vector<128x128xbf16>, vector<16x128xf32> -> vector<16x128xf32>
    %c7 = arith.constant 7 : index
    %c0_84 = arith.constant 0 : index
    %c0_85 = arith.constant 0 : index
    %247 = vector.load %arg6[%c7, %c0_84, %c0_85] : memref<9x128x128xbf16, #tpu.memory_space<vmem>>, vector<1x128x128xbf16>
    %248 = vector.shape_cast %247 : vector<1x128x128xbf16> to vector<128x128xbf16>
    %249 = arith.truncf %242 : vector<16x128xf32> to vector<16x128xbf16>
    %cst_86 = arith.constant dense<0.000000e+00> : vector<16x128xf32>
    %250 = tpu.matmul %249, %248, %cst_86 {dimension_numbers = #tpu.dot_dimension_numbers<[1], [0], [0], [1], [0, 0, 1, 1], [], []>} : vector<16x128xbf16>, vector<128x128xbf16>, vector<16x128xf32> -> vector<16x128xf32>
    %251 = arith.addf %246, %250 : vector<16x128xf32>
    %252 = vector.extract_strided_slice %5 {offsets = [10, 0], sizes = [1, 128], strides = [1, 1]} : vector<12x128xf32> to vector<1x128xf32>
    %253 = vector.broadcast %252 : vector<1x128xf32> to vector<16x128xf32>
    %254 = arith.addf %251, %253 : vector<16x128xf32>
    %cst_87 = arith.constant 0.000000e+00 : f32
    %255 = vector.broadcast %cst_87 : f32 to vector<16x128xf32>
    %256 = arith.maximumf %254, %255 : vector<16x128xf32>
    %c8 = arith.constant 8 : index
    %c0_88 = arith.constant 0 : index
    %c0_89 = arith.constant 0 : index
    %257 = vector.load %arg6[%c8, %c0_88, %c0_89] : memref<9x128x128xbf16, #tpu.memory_space<vmem>>, vector<1x128x128xbf16>
    %258 = vector.shape_cast %257 : vector<1x128x128xbf16> to vector<128x128xbf16>
    %259 = arith.truncf %256 : vector<16x128xf32> to vector<16x128xbf16>
    %cst_90 = arith.constant dense<0.000000e+00> : vector<16x128xf32>
    %260 = tpu.matmul %259, %258, %cst_90 {dimension_numbers = #tpu.dot_dimension_numbers<[1], [0], [0], [1], [0, 0, 1, 1], [], []>} : vector<16x128xbf16>, vector<128x128xbf16>, vector<16x128xf32> -> vector<16x128xf32>
    %261 = vector.extract_strided_slice %5 {offsets = [11, 0], sizes = [1, 128], strides = [1, 1]} : vector<12x128xf32> to vector<1x128xf32>
    %262 = vector.broadcast %261 : vector<1x128xf32> to vector<16x128xf32>
    %263 = arith.addf %260, %262 : vector<16x128xf32>
    %264 = arith.negf %263 : vector<16x128xf32>
    %265 = math.exp %264 : vector<16x128xf32>
    %cst_91 = arith.constant 1.000000e+00 : f32
    %266 = vector.broadcast %cst_91 : f32 to vector<16x128xf32>
    %267 = arith.addf %266, %265 : vector<16x128xf32>
    %268 = arith.divf %266, %267 : vector<16x128xf32>
    %269 = arith.mulf %268, %238 : vector<16x128xf32>
    %cst_92 = arith.constant 1.000000e+00 : f32
    %270 = vector.broadcast %cst_92 : f32 to vector<16x128xf32>
    %271 = arith.subf %270, %268 : vector<16x128xf32>
    %272 = arith.mulf %271, %242 : vector<16x128xf32>
    %c0_93 = arith.constant 0 : index
    %c0_94 = arith.constant 0 : index
    %273 = vector.load %arg11[%c0_93, %c0_94] : memref<16x256xf32, #tpu.memory_space<vmem>>, vector<16x128xf32>
    tpu.vector_store %arg11[%c0_93, %c0_94], %269 {strides = array<i32>} : memref<16x256xf32, #tpu.memory_space<vmem>>, vector<16x128xf32>,
    %c0_95 = arith.constant 0 : index
    %c128 = arith.constant 128 : index
    %274 = vector.load %arg11[%c0_95, %c128] : memref<16x256xf32, #tpu.memory_space<vmem>>, vector<16x128xf32>
    tpu.vector_store %arg11[%c0_95, %c128], %272 {strides = array<i32>} : memref<16x256xf32, #tpu.memory_space<vmem>>, vector<16x128xf32>,
    return
  }
  func.func @transform_0(%arg0: i32) -> (i32, i32) {
    %c0_i32 = arith.constant 0 : i32
    %c0_i32_0 = arith.constant 0 : i32
    return %arg0, %c0_i32 : i32, i32
  }
  func.func @transform_1(%arg0: i32) -> (i32, i32) {
    %c0_i32 = arith.constant 0 : i32
    %c0_i32_0 = arith.constant 0 : i32
    return %arg0, %c0_i32 : i32, i32
  }
  func.func @transform_2(%arg0: i32) -> (i32, i32) {
    %c0_i32 = arith.constant 0 : i32
    %c0_i32_0 = arith.constant 0 : i32
    return %arg0, %c0_i32 : i32, i32
  }
  func.func @transform_3(%arg0: i32) -> (i32, i32) {
    %c0_i32 = arith.constant 0 : i32
    %c0_i32_0 = arith.constant 0 : i32
    return %arg0, %c0_i32 : i32, i32
  }
  func.func @transform_4(%arg0: i32) -> (i32, i32) {
    %c0_i32 = arith.constant 0 : i32
    %c0_i32_0 = arith.constant 0 : i32
    return %arg0, %c0_i32 : i32, i32
  }
  func.func @transform_5(%arg0: i32) -> (i32, i32, i32) {
    %c0_i32 = arith.constant 0 : i32
    %c0_i32_0 = arith.constant 0 : i32
    %c0_i32_1 = arith.constant 0 : i32
    %c0_i32_2 = arith.constant 0 : i32
    return %c0_i32, %c0_i32_0, %c0_i32_1 : i32, i32, i32
  }
  func.func @transform_6(%arg0: i32) -> (i32, i32) {
    %c0_i32 = arith.constant 0 : i32
    %c0_i32_0 = arith.constant 0 : i32
    %c0_i32_1 = arith.constant 0 : i32
    return %c0_i32, %c0_i32_0 : i32, i32
  }
  func.func @transform_7(%arg0: i32) -> (i32, i32) {
    %c0_i32 = arith.constant 0 : i32
    %c0_i32_0 = arith.constant 0 : i32
    %c0_i32_1 = arith.constant 0 : i32
    return %c0_i32, %c0_i32_0 : i32, i32
  }
  func.func @transform_8(%arg0: i32) -> (i32, i32) {
    %c0_i32 = arith.constant 0 : i32
    %c0_i32_0 = arith.constant 0 : i32
    %c0_i32_1 = arith.constant 0 : i32
    return %c0_i32, %c0_i32_0 : i32, i32
  }
  func.func @transform_9(%arg0: i32) -> (i32, i32) {
    %c0_i32 = arith.constant 0 : i32
    %c0_i32_0 = arith.constant 0 : i32
    %c0_i32_1 = arith.constant 0 : i32
    return %c0_i32, %c0_i32_0 : i32, i32
  }
  func.func @transform_10(%arg0: i32) -> (i32, i32) {
    %c0_i32 = arith.constant 0 : i32
    %c0_i32_0 = arith.constant 0 : i32
    return %arg0, %c0_i32 : i32, i32
  }
}

</mosaic_0001>

<llo_original>
// kernel: tpu_custom_call.1
$region0: #{tpu_custom_call.1}
  #allocation0 [shape = 'u32[]', space=smem, size = 0x4, offset = 0x4, fixed_abs, tag = 'smem constant byte address 0x4 - core index']
  #allocation1 [shape = 'u32[72,128]{1,0:T(1,128)}', space=vmem, size = 0x9000, scoped, tag = 'internal scratch']
  %s0 = inlined_call_operand.vmem [shape: f32[16,8], index: 0, kind: input, shape index: {}]
  %s1 = inlined_call_operand.vmem [shape: f32[16,128], index: 1, kind: input, shape index: {}]
  %s2 = inlined_call_operand.vmem [shape: f32[16,128], index: 2, kind: input, shape index: {}]
  %s3 = inlined_call_operand.hbm [shape: f32[16,128], index: 3, kind: input, shape index: {}]
  %s4 = inlined_call_operand.hbm [shape: f32[16,128], index: 4, kind: input, shape index: {}]
  %s5 = inlined_call_operand.hbm [shape: bf16[9,128,128], index: 5, kind: input, shape index: {}]
  %s6 = inlined_call_operand.hbm [shape: f32[12,128], index: 6, kind: input, shape index: {}]
  %s7 = inlined_call_operand.vmem [shape: f32[8,28], index: 7, kind: input, shape index: {}]
  %s8 = inlined_call_operand.vmem [shape: f32[16,8], index: 8, kind: input, shape index: {}]
  %s9 = inlined_call_operand.vmem [shape: f32[1,36], index: 9, kind: input, shape index: {}]
  %s10 = inlined_call_operand.hbm [shape: f32[16,256], index: 10, kind: output, shape index: {}]
  %s11 = sld [smem:[#allocation0]]
  $region66: #{tpu_custom_call.1} parent=0
    _
  %s13 = ssub.s32 1, %s11
  %s14 = scalar_select 0, %s13, %s11
  $region1: #{tpu_custom_call.1} parent=0
    #allocation2 [shape = 'u8[8192]{0}', space=vmem, size = 0x2000, scoped, tag = 'input window, operand 3, single buffered']
    #allocation3 [shape = 's32[1]{0}', space=sflag, size = 0x4, scoped, tag = 'scoped memory for tpu_custom_call.1']
    #allocation4 [shape = 's32[1]{0}', space=sflag, size = 0x4, scoped, tag = 'scoped memory for tpu_custom_call.1']
    #allocation5 [shape = 'u8[8192]{0}', space=vmem, size = 0x2000, scoped, tag = 'input window, operand 4, single buffered']
    #allocation6 [shape = 's32[1]{0}', space=sflag, size = 0x4, scoped, tag = 'scoped memory for tpu_custom_call.1']
    #allocation7 [shape = 'u8[294912]{0}', space=vmem, size = 0x48000, scoped, tag = 'input window, operand 5, single buffered']
    #allocation8 [shape = 'u8[8192]{0}', space=vmem, size = 0x2000, scoped, tag = 'input window, operand 6, single buffered']
    #allocation9 [shape = 's32[1]{0}', space=sflag, size = 0x4, scoped, tag = 'scoped memory for tpu_custom_call.1']
    #allocation10 [shape = 'u8[16384]{0}', space=vmem, size = 0x4000, scoped, tag = 'output window, operand 0, single buffered']
    %15 = vsyncpa [#allocation3], 0
    %16 = vsyncpa [#allocation6], 0
    %17 = vsyncpa [#allocation9], 0
    %18 = vsyncpa [#allocation4], 0
    // Predicated region
    $region2: #{tpu_custom_call.1} parent=1 // pred_check
      _
    $region3: #{tpu_custom_call.1} parent=1 // pred_check_branch
      %20 = sbr.rel (0) target = $region5
    $region4: #{tpu_custom_call.1} parent=1 // pred_region
      _
    $region5: #{tpu_custom_call.1} parent=1 // pred_fallthru
      _
    // Predicated region
    $region6: #{tpu_custom_call.1} parent=1 // pred_check
      _
    $region7: #{tpu_custom_call.1} parent=1 // pred_check_branch
      %22 = sbr.rel (0) target = $region9
    $region8: #{tpu_custom_call.1} parent=1 // pred_region
      _
    $region9: #{tpu_custom_call.1} parent=1 // pred_fallthru
      _
    // Predicated region
    $region10: #{tpu_custom_call.1} parent=1 // pred_check
      _
    $region11: #{tpu_custom_call.1} parent=1 // pred_check_branch
      %24 = sbr.rel (0) target = $region13
    $region12: #{tpu_custom_call.1} parent=1 // pred_region
      _
    $region13: #{tpu_custom_call.1} parent=1 // pred_fallthru
      _
    // Predicated region
    $region14: #{tpu_custom_call.1} parent=1 // pred_check
      _
    $region15: #{tpu_custom_call.1} parent=1 // pred_check_branch
      %26 = sbr.rel (0) target = $region17
    $region16: #{tpu_custom_call.1} parent=1 // pred_region
      %28 = vsyncadd [#allocation3], 0
      %s29 = sshll.u32 %s3, 4
      %s30 = int_to_ptr.hbm [resolvable:$true] %s29
      %s31 = sshll.u32 [#allocation2], 4
      %s32 = int_to_ptr.vmem [resolvable:$true] %s31
      %37 = dma.hbm_to_vmem [thread:$0]  %s30, 256, %s32, [#allocation3], 128, 128, 8
    $region17: #{tpu_custom_call.1} parent=1 // pred_fallthru
      _
    // Predicated region
    $region18: #{tpu_custom_call.1} parent=1 // pred_check
      _
    $region19: #{tpu_custom_call.1} parent=1 // pred_check_branch
      %39 = sbr.rel (0) target = $region21
    $region20: #{tpu_custom_call.1} parent=1 // pred_region
      %41 = vsyncadd [#allocation6], 0
      %s42 = sshll.u32 %s4, 4
      %s43 = int_to_ptr.hbm [resolvable:$true] %s42
      %s44 = sshll.u32 [#allocation5], 4
      %s45 = int_to_ptr.vmem [resolvable:$true] %s44
      %50 = dma.hbm_to_vmem [thread:$0]  %s43, 256, %s45, [#allocation6], 128, 128, 8
    $region21: #{tpu_custom_call.1} parent=1 // pred_fallthru
      _
    // Predicated region
    $region22: #{tpu_custom_call.1} parent=1 // pred_check
      _
    $region23: #{tpu_custom_call.1} parent=1 // pred_check_branch
      %52 = sbr.rel (0) target = $region25
    $region24: #{tpu_custom_call.1} parent=1 // pred_region
      %54 = vsyncadd [#allocation6], 0
      %s55 = sshll.u32 %s5, 4
      %s56 = int_to_ptr.hbm [resolvable:$true] %s55
      %s57 = sshll.u32 [#allocation7], 4
      %s58 = int_to_ptr.vmem [resolvable:$true] %s57
      %63 = dma.hbm_to_vmem [thread:$0]  %s56, 9216, %s58, [#allocation6], 64, 64, 4
    $region25: #{tpu_custom_call.1} parent=1 // pred_fallthru
      _
    // Predicated region
    $region26: #{tpu_custom_call.1} parent=1 // pred_check
      _
    $region27: #{tpu_custom_call.1} parent=1 // pred_check_branch
      %65 = sbr.rel (0) target = $region29
    $region28: #{tpu_custom_call.1} parent=1 // pred_region
      %67 = vsyncadd [#allocation9], 0
      %s68 = sshll.u32 %s6, 4
      %s69 = int_to_ptr.hbm [resolvable:$true] %s68
      %s70 = sshll.u32 [#allocation8], 4
      %s71 = int_to_ptr.vmem [resolvable:$true] %s70
      %76 = dma.hbm_to_vmem [thread:$0]  %s69, 256, %s71, [#allocation9], 128, 128, 8
    $region29: #{tpu_custom_call.1} parent=1 // pred_fallthru
      _
    // Predicated region
    $region30: #{tpu_custom_call.1} parent=1 // pred_check
      _
    $region31: #{tpu_custom_call.1} parent=1 // pred_check_branch
      %78 = sbr.rel (0) target = $region33
    $region32: #{tpu_custom_call.1} parent=1 // pred_region
      _
    $region33: #{tpu_custom_call.1} parent=1 // pred_fallthru
      _
    // Predicated region
    $region34: #{tpu_custom_call.1} parent=1 // pred_check
      _
    $region35: #{tpu_custom_call.1} parent=1 // pred_check_branch
      %80 = sbr.rel (0) target = $region37
    $region36: #{tpu_custom_call.1} parent=1 // pred_region
      _
    $region37: #{tpu_custom_call.1} parent=1 // pred_fallthru
      _
    // Predicated region
    $region38: #{tpu_custom_call.1} parent=1 // pred_check
      _
    $region39: #{tpu_custom_call.1} parent=1 // pred_check_branch
      %82 = sbr.rel (0) target = $region41
    $region40: #{tpu_custom_call.1} parent=1 // pred_region
      _
    $region41: #{tpu_custom_call.1} parent=1 // pred_fallthru
      _
    // Predicated region
    $region42: #{tpu_custom_call.1} parent=1 // pred_check
      _
    $region43: #{tpu_custom_call.1} parent=1 // pred_check_branch
      %84 = sbr.rel (0) target = $region45
    $region44: #{tpu_custom_call.1} parent=1 // pred_region
      %86 = dma.done [#allocation3], 256
    $region45: #{tpu_custom_call.1} parent=1 // pred_fallthru
      _
    // Predicated region
    $region46: #{tpu_custom_call.1} parent=1 // pred_check
      _
    $region47: #{tpu_custom_call.1} parent=1 // pred_check_branch
      %88 = sbr.rel (0) target = $region49
    $region48: #{tpu_custom_call.1} parent=1 // pred_region
      %90 = dma.done [#allocation6], 256
    $region49: #{tpu_custom_call.1} parent=1 // pred_fallthru
      _
    // Predicated region
    $region50: #{tpu_custom_call.1} parent=1 // pred_check
      _
    $region51: #{tpu_custom_call.1} parent=1 // pred_check_branch
      %92 = sbr.rel (0) target = $region53
    $region52: #{tpu_custom_call.1} parent=1 // pred_region
      %94 = dma.done [#allocation6], 9216
    $region53: #{tpu_custom_call.1} parent=1 // pred_fallthru
      _
    // Predicated region
    $region54: #{tpu_custom_call.1} parent=1 // pred_check
      _
    $region55: #{tpu_custom_call.1} parent=1 // pred_check_branch
      %96 = sbr.rel (0) target = $region57
    $region56: #{tpu_custom_call.1} parent=1 // pred_region
      %98 = dma.done [#allocation9], 256
    $region57: #{tpu_custom_call.1} parent=1 // pred_fallthru
      _
    %v99 = vld [vmem:[%s0] sm:$0xff]
    %v100 = vld [vmem:[%s0 + $0x8] sm:$0xff]
    %v101 = vld [vmem:[%s1] sm:$0xff]
    %v102 = vld [vmem:[%s1 + $0x8] sm:$0xff]
    %v103 = vld [vmem:[%s2] sm:$0xff]
    %v104 = vld [vmem:[%s2 + $0x8] sm:$0xff]
    %v105 = vld [vmem:[#allocation2] sm:$0xff]
    %v106 = vld [vmem:[#allocation2 + $0x8] sm:$0xff]
    %v107 = vld [vmem:[#allocation5] sm:$0xff]
    %v108 = vld [vmem:[#allocation5 + $0x8] sm:$0xff]
    %v109 = vld [vmem:[#allocation8] sm:$0xff]
    %v110 = vld [vmem:[#allocation8 + $0x8] sm:$0xf]
    %v111 = vld [vmem:[%s7] sm:$0xff]
    %v112 = vld [vmem:[%s8] sm:$0xff]
    %v113 = vld [vmem:[%s8 + $0x8] sm:$0xff]
    %v114 = vld [vmem:[%s9] sm:$0x1]
    %116 = vset.pattern.permute.xlu0 4
    %117 = vperm.xlu0 %116, %v99
    %v118 = vpop.permute.xlu0 %117
    %121 = vset.pattern.permute.xlu0 4
    %122 = vperm.xlu0 %121, %v100
    %v123 = vpop.permute.xlu0 %122
    %125 = vset.pattern.permute.xlu0 5
    %126 = vperm.xlu0 %125, %v99
    %v127 = vpop.permute.xlu0 %126
    %129 = vset.pattern.permute.xlu0 5
    %130 = vperm.xlu0 %129, %v100
    %v131 = vpop.permute.xlu0 %130
    %133 = vset.pattern.permute.xlu0 6
    %134 = vperm.xlu0 %133, %v99
    %v135 = vpop.permute.xlu0 %134
    %137 = vset.pattern.permute.xlu0 6
    %138 = vperm.xlu0 %137, %v100
    %v139 = vpop.permute.xlu0 %138
    %141 = vset.pattern.permute.xlu0 7
    %142 = vperm.xlu0 %141, %v99
    %v143 = vpop.permute.xlu0 %142
    %145 = vset.pattern.permute.xlu0 7
    %146 = vperm.xlu0 %145, %v100
    %v147 = vpop.permute.xlu0 %146
    %vm149 = vcmp.gt.f32.partialorder %v127, 0.7
    %vm150 = vcmp.gt.f32.partialorder %v131, 0.7
    %v151 = vmul.f32 %v127, %v107
    %v152 = vmul.f32 %v131, %v108
    %v153 = vsub.f32 1.0, %v127
    %v154 = vsub.f32 1.0, %v131
    %v155 = vmul.f32 %v153, %v103
    %v156 = vmul.f32 %v154, %v104
    %v157 = vadd.f32 %v151, %v155
    %v158 = vadd.f32 %v152, %v156
    %v159 = vsel %vm149, %v107, %v157
    %v160 = vsel %vm150, %v108, %v158
    %vm161 = vcmp.eq.f32.partialorder %v143, 1.0
    %vm162 = vcmp.eq.f32.partialorder %v147, 1.0
    %v163 = vsel %vm161, %v159, %v103
    %v164 = vsel %vm162, %v160, %v104
    %vm165 = vcmp.gt.f32.partialorder %v118, 0.7
    %vm166 = vcmp.gt.f32.partialorder %v123, 0.7
    %v167 = vmul.f32 %v118, %v105
    %v168 = vmul.f32 %v123, %v106
    %v169 = vsub.f32 1.0, %v118
    %v170 = vsub.f32 1.0, %v123
    %v171 = vmul.f32 %v169, %v101
    %v172 = vmul.f32 %v170, %v102
    %v173 = vadd.f32 %v167, %v171
    %v174 = vadd.f32 %v168, %v172
    %v175 = vsel %vm165, %v105, %v173
    %v176 = vsel %vm166, %v106, %v174
    %vm177 = vcmp.eq.f32.partialorder %v143, 2.0
    %vm178 = vcmp.eq.f32.partialorder %v147, 2.0
    %v179 = vsel %vm177, %v175, %v101
    %v180 = vsel %vm178, %v176, %v102
    %v182 = vperm.slane %v114, 0
    %vm184 = vcmask 64512
    %v185 = vsel %vm184, %v99, 0
    %v187 = vsel %vm184, %v100, 0
    %189 = vmatpush.msra.mxu0 0.0
    %190 = vmatpush.msra.mxu0 0.0
    %191 = vmatpush.msra.mxu0 0.0
    %192 = vmatpush.msra.mxu0 0.0
    %193 = vmatpush.msra.mxu0 0.0
    %194 = vmatpush.msra.mxu0 0.0
    %195 = vmatpush.msra.mxu0 0.0
    %196 = vmatpush.msra.mxu0 0.0
    %197 = vmatpush.msra.mxu0 0.0
    %198 = vmatpush.msra.mxu0 0.0
    %199 = vmatpush.msra.mxu0 0.0
    %200 = vmatpush.msra.mxu0 0.0
    %201 = vmatpush.msra.mxu0 0.0
    %202 = vmatpush.msra.mxu0 0.0
    %203 = vmatpush.msra.mxu0 0.0
    %204 = vmatpush.msra.mxu0 %v111
    %205 = vmatmul.f32.gmra.mxu0 %v185
    %v206 = vpop.f32.mrf.mxu0
    %v207 = vadd.f32 %v182, %v206
    %208 = vmatmul.f32.gmra.mxu0 %v187
    %v209 = vpop.f32.mrf.mxu0
    %v210 = vadd.f32 %v182, %v209
    %211 = vdwg.mxu0
    %v212 = vmax.f32 %v207, 0.0
    %v213 = vmax.f32 %v210, 0.0
    %214 = vrot.lane.b32.xlu0 %v182, 104
    %v215 = vpop.permute.xlu0 %214
    %vm217 = vcmask 130048
    %v219 = vsel %vm217, %v212, 0
    %v222 = vsel %vm217, %v213, 0
    %224 = vmatpush.msra.mxu0 0.0
    %225 = vmatpush.msra.mxu0 0.0
    %226 = vmatpush.msra.mxu0 0.0
    %227 = vmatpush.msra.mxu0 0.0
    %228 = vmatpush.msra.mxu0 0.0
    %229 = vmatpush.msra.mxu0 0.0
    %230 = vmatpush.msra.mxu0 0.0
    %231 = vmatpush.msra.mxu0 0.0
    %232 = vmatpush.msra.mxu0 0.0
    %233 = vmatpush.msra.mxu0 0.0
    %234 = vmatpush.msra.mxu0 0.0
    %235 = vmatpush.msra.mxu0 0.0
    %236 = vmatpush.msra.mxu0 0.0
    %237 = vmatpush.msra.mxu0 0.0
    %238 = vmatpush.msra.mxu0 %v113
    %239 = vmatpush.msra.mxu0 %v112
    %240 = vmatmul.f32.gmra.mxu0 %v219
    %v241 = vpop.f32.mrf.mxu0
    %v242 = vadd.f32 %v215, %v241
    %243 = vmatmul.f32.gmra.mxu0 %v222
    %v244 = vpop.f32.mrf.mxu0
    %v245 = vadd.f32 %v215, %v244
    %246 = vdwg.mxu0
    %v247 = vmax.f32 %v242, 0.0
    %v248 = vmax.f32 %v245, 0.0
    %250 = vrot.lane.b32.xlu0 %v111, 104
    %v251 = vpop.permute.xlu0 %250
    %253 = vrot.lane.b32.xlu0 %v182, 96
    %v254 = vpop.permute.xlu0 %253
    %v257 = vsel %vm184, %v247, 0
    %v260 = vsel %vm184, %v248, 0
    %262 = vmatpush.msra.mxu0 0.0
    %263 = vmatpush.msra.mxu0 0.0
    %264 = vmatpush.msra.mxu0 0.0
    %265 = vmatpush.msra.mxu0 0.0
    %266 = vmatpush.msra.mxu0 0.0
    %267 = vmatpush.msra.mxu0 0.0
    %268 = vmatpush.msra.mxu0 0.0
    %269 = vmatpush.msra.mxu0 0.0
    %270 = vmatpush.msra.mxu0 0.0
    %271 = vmatpush.msra.mxu0 0.0
    %272 = vmatpush.msra.mxu0 0.0
    %273 = vmatpush.msra.mxu0 0.0
    %274 = vmatpush.msra.mxu0 0.0
    %275 = vmatpush.msra.mxu0 0.0
    %276 = vmatpush.msra.mxu0 0.0
    %277 = vmatpush.msra.mxu0 %v251
    %278 = vmatmul.f32.gmra.mxu0 %v257
    %v279 = vpop.f32.mrf.mxu0
    %v280 = vadd.f32 %v254, %v279
    %281 = vmatmul.f32.gmra.mxu0 %v260
    %v282 = vpop.f32.mrf.mxu0
    %v283 = vadd.f32 %v254, %v282
    %284 = vdwg.mxu0
    %vm285 = vcmask 15360
    %v286 = vsel %vm285, %v280, -inf
    %287 = vmax.xlane.f32.xlu0 %v286
    %v288 = vpop.xlane.xlu0 %287
    %v289 = vsel %vm285, %v283, -inf
    %290 = vmax.xlane.f32.xlu0 %v289
    %v291 = vpop.xlane.xlu0 %290
    %v292 = vsub.f32 %v280, %v288
    %v293 = vsub.f32 %v283, %v291
    %v294 = vmul.f32 %v292, 1.442695
    %v295 = vpow.pop %v294
    %v296 = vmul.f32 %v293, 1.442695
    %v297 = vpow.pop %v296
    %v298 = vsel %vm285, %v295, 0.0
    %299 = vadd.xlane.f32.xlu0 %v298
    %v300 = vpop.xlane.xlu0 %299
    %v301 = vsel %vm285, %v297, 0.0
    %302 = vadd.xlane.f32.xlu0 %v301
    %v303 = vpop.xlane.xlu0 %302
    %v304 = vrcp.pop %v300
    %v305 = vmul.f32 %v300, %v304
    %v306 = vsub.f32 1.0, %v305
    %v307 = vmul.f32 %v304, %v306
    %v308 = vadd.f32 %v304, %v307
    %vm309 = vweird.f32 %v300
    %vm310 = vweird.f32 %v304
    %vm311 = vmor %vm309, %vm310
    %v312 = vsel %vm311, %v304, %v308
    %v313 = vand.u32 2147483647, %v300
    %vm314 = vcmp.eq.f32.partialorder %v313, 8.507059e+37
    %v315 = vand.u32 %v300, 2147483648
    %v316 = vor.u32 1.1754944e-38, %v315
    %v317 = vsel %vm314, %v316, %v312
    %v318 = vmul.f32 %v295, %v317
    %v319 = vrcp.pop %v303
    %v320 = vmul.f32 %v303, %v319
    %v321 = vsub.f32 1.0, %v320
    %v322 = vmul.f32 %v319, %v321
    %v323 = vadd.f32 %v319, %v322
    %vm324 = vweird.f32 %v303
    %vm325 = vweird.f32 %v319
    %vm326 = vmor %vm324, %vm325
    %v327 = vsel %vm326, %v319, %v323
    %v328 = vand.u32 2147483647, %v303
    %vm329 = vcmp.eq.f32.partialorder %v328, 8.507059e+37
    %v330 = vand.u32 %v303, 2147483648
    %v331 = vor.u32 1.1754944e-38, %v330
    %v332 = vsel %vm329, %v331, %v327
    %v333 = vmul.f32 %v297, %v332
    %334 = vrot.lane.b32.xlu0 %v212, 112
    %v335 = vpop.permute.xlu0 %334
    %336 = vrot.lane.b32.xlu0 %v213, 112
    %v337 = vpop.permute.xlu0 %336
    %338 = vrot.lane.b32.xlu0 %v111, 102
    %v339 = vpop.permute.xlu0 %338
    %341 = vrot.lane.b32.xlu0 %v182, 94
    %v342 = vpop.permute.xlu0 %341
    %v344 = vsel %vm184, %v335, 0
    %v346 = vsel %vm184, %v337, 0
    %348 = vmatpush.msra.mxu0 0.0
    %349 = vmatpush.msra.mxu0 0.0
    %350 = vmatpush.msra.mxu0 0.0
    %351 = vmatpush.msra.mxu0 0.0
    %352 = vmatpush.msra.mxu0 0.0
    %353 = vmatpush.msra.mxu0 0.0
    %354 = vmatpush.msra.mxu0 0.0
    %355 = vmatpush.msra.mxu0 0.0
    %356 = vmatpush.msra.mxu0 0.0
    %357 = vmatpush.msra.mxu0 0.0
    %358 = vmatpush.msra.mxu0 0.0
    %359 = vmatpush.msra.mxu0 0.0
    %360 = vmatpush.msra.mxu0 0.0
    %361 = vmatpush.msra.mxu0 0.0
    %362 = vmatpush.msra.mxu0 0.0
    %363 = vmatpush.msra.mxu0 %v339
    %364 = vmatmul.f32.gmra.mxu0 %v344
    %v365 = vpop.f32.mrf.mxu0
    %v366 = vadd.f32 %v342, %v365
    %367 = vmatmul.f32.gmra.mxu0 %v346
    %v368 = vpop.f32.mrf.mxu0
    %v369 = vadd.f32 %v342, %v368
    %370 = vdwg.mxu0
    %v371 = vsel %vm285, %v366, -inf
    %372 = vmax.xlane.f32.xlu0 %v371
    %v373 = vpop.xlane.xlu0 %372
    %v374 = vsel %vm285, %v369, -inf
    %375 = vmax.xlane.f32.xlu0 %v374
    %v376 = vpop.xlane.xlu0 %375
    %v377 = vsub.f32 %v366, %v373
    %v378 = vsub.f32 %v369, %v376
    %v379 = vmul.f32 %v377, 1.442695
    %v380 = vpow.pop %v379
    %v381 = vmul.f32 %v378, 1.442695
    %v382 = vpow.pop %v381
    %v383 = vsel %vm285, %v380, 0.0
    %384 = vadd.xlane.f32.xlu0 %v383
    %v385 = vpop.xlane.xlu0 %384
    %v386 = vsel %vm285, %v382, 0.0
    %387 = vadd.xlane.f32.xlu0 %v386
    %v388 = vpop.xlane.xlu0 %387
    %v389 = vrcp.pop %v385
    %v390 = vmul.f32 %v385, %v389
    %v391 = vsub.f32 1.0, %v390
    %v392 = vmul.f32 %v389, %v391
    %v393 = vadd.f32 %v389, %v392
    %vm394 = vweird.f32 %v385
    %vm395 = vweird.f32 %v389
    %vm396 = vmor %vm394, %vm395
    %v397 = vsel %vm396, %v389, %v393
    %v398 = vand.u32 2147483647, %v385
    %vm399 = vcmp.eq.f32.partialorder %v398, 8.507059e+37
    %v400 = vand.u32 %v385, 2147483648
    %v401 = vor.u32 1.1754944e-38, %v400
    %v402 = vsel %vm399, %v401, %v397
    %v403 = vmul.f32 %v380, %v402
    %v404 = vrcp.pop %v388
    %v405 = vmul.f32 %v388, %v404
    %v406 = vsub.f32 1.0, %v405
    %v407 = vmul.f32 %v404, %v406
    %v408 = vadd.f32 %v404, %v407
    %vm409 = vweird.f32 %v388
    %vm410 = vweird.f32 %v404
    %vm411 = vmor %vm409, %vm410
    %v412 = vsel %vm411, %v404, %v408
    %v413 = vand.u32 2147483647, %v388
    %vm414 = vcmp.eq.f32.partialorder %v413, 8.507059e+37
    %v415 = vand.u32 %v388, 2147483648
    %v416 = vor.u32 1.1754944e-38, %v415
    %v417 = vsel %vm414, %v416, %v412
    %v418 = vmul.f32 %v382, %v417
    %419 = vset.pattern.permute.xlu0 0
    %420 = vperm.xlu0 %419, %v99
    %v421 = vpop.permute.xlu0 %420
    %423 = vset.pattern.permute.xlu0 0
    %424 = vperm.xlu0 %423, %v100
    %v425 = vpop.permute.xlu0 %424
    %v427 = vsub.f32 1.0, %v421
    %v428 = vsub.f32 1.0, %v425
    %v429 = vmax.f32 %v427, 0.1
    %v430 = vmax.f32 %v428, 0.1
    %431 = vset.pattern.permute.xlu0 1
    %432 = vperm.xlu0 %431, %v99
    %v433 = vpop.permute.xlu0 %432
    %435 = vset.pattern.permute.xlu0 1
    %436 = vperm.xlu0 %435, %v100
    %v437 = vpop.permute.xlu0 %436
    %v439 = vsub.f32 1.0, %v433
    %v440 = vsub.f32 1.0, %v437
    %v441 = vmax.f32 %v439, 0.1
    %v442 = vmax.f32 %v440, 0.1
    %v443 = vld [vmem:[#allocation7] sm:$0xf]
    %v444 = vld [vmem:[#allocation7 + $0x4] sm:$0xf]
    %v445 = vld [vmem:[#allocation7 + $0x8] sm:$0xf]
    %v446 = vld [vmem:[#allocation7 + $0xc] sm:$0xf]
    %v447 = vld [vmem:[#allocation7 + $0x10] sm:$0xf]
    %v448 = vld [vmem:[#allocation7 + $0x14] sm:$0xf]
    %v449 = vld [vmem:[#allocation7 + $0x18] sm:$0xf]
    %v450 = vld [vmem:[#allocation7 + $0x1c] sm:$0xf]
    %v451 = vld [vmem:[#allocation7 + $0x20] sm:$0xf]
    %v452 = vld [vmem:[#allocation7 + $0x24] sm:$0xf]
    %v453 = vld [vmem:[#allocation7 + $0x28] sm:$0xf]
    %v454 = vld [vmem:[#allocation7 + $0x2c] sm:$0xf]
    %v455 = vld [vmem:[#allocation7 + $0x30] sm:$0xf]
    %v456 = vld [vmem:[#allocation7 + $0x34] sm:$0xf]
    %v457 = vld [vmem:[#allocation7 + $0x38] sm:$0xf]
    %v458 = vld [vmem:[#allocation7 + $0x3c] sm:$0xf]
    %v459 = vpack.c.bf16 %v180, %v179
    %v460 = vperm.slane %v109, 0
    %v477 = vunpack.c.l.b16 %v443
    %v478 = vunpack.c.l.b16 %v444
    %v479 = vunpack.c.l.b16 %v445
    %v480 = vunpack.c.l.b16 %v446
    %v481 = vunpack.c.l.b16 %v447
    %v482 = vunpack.c.l.b16 %v448
    %v483 = vunpack.c.l.b16 %v449
    %v484 = vunpack.c.l.b16 %v450
    %v485 = vunpack.c.l.b16 %v451
    %v486 = vunpack.c.l.b16 %v452
    %v487 = vunpack.c.l.b16 %v453
    %v488 = vunpack.c.l.b16 %v454
    %v489 = vunpack.c.l.b16 %v455
    %v490 = vunpack.c.l.b16 %v456
    %v491 = vunpack.c.l.b16 %v457
    %v492 = vunpack.c.l.b16 %v458
    %v493 = vpack.c.b16 %v478, %v477
    %v494 = vpack.c.b16 %v480, %v479
    %v495 = vpack.c.b16 %v482, %v481
    %v496 = vpack.c.b16 %v484, %v483
    %v497 = vpack.c.b16 %v486, %v485
    %v498 = vpack.c.b16 %v488, %v487
    %v499 = vpack.c.b16 %v490, %v489
    %v500 = vpack.c.b16 %v492, %v491
    %509 = vmatpush.bf16.msra.mxu0 %v500
    %510 = vmatpush.bf16.msra.mxu0 %v499
    %511 = vmatpush.bf16.msra.mxu0 %v498
    %512 = vmatpush.bf16.msra.mxu0 %v497
    %513 = vmatpush.bf16.msra.mxu0 %v496
    %514 = vmatpush.bf16.msra.mxu0 %v495
    %515 = vmatpush.bf16.msra.mxu0 %v494
    %516 = vmatpush.bf16.msra.mxu0 %v493
    %517 = vmatmul.bf16.gmra.mxu0 %v459
    %v518 = vpop.f32.mrf.mxu0
    %v519 = vadd.f32 %v460, %v518
    %v520 = vpop.f32.mrf.mxu0
    %v521 = vadd.f32 %v460, %v520
    %522 = vdwg.mxu0
    %523 = vadd.xlane.f32.xlu0 %v519
    %v524 = vpop.xlane.xlu0 %523
    %525 = vadd.xlane.f32.xlu0 %v521
    %v526 = vpop.xlane.xlu0 %525
    %v527 = vrcp.pop 128.0
    %v528 = vmul.f32 128.0, %v527
    %v529 = vsub.f32 1.0, %v528
    %v530 = vmul.f32 %v527, %v529
    %v531 = vadd.f32 %v527, %v530
    %vm532 = vweird.f32 %v527
    %v533 = vsel %vm532, %v527, %v531
    %v534 = vmul.f32 %v524, %v533
    %v535 = vmul.f32 %v526, %v533
    %v536 = vsub.f32 %v519, %v534
    %v537 = vsub.f32 %v521, %v535
    %v538 = vmul.f32 %v536, %v536
    %v539 = vmul.f32 %v537, %v537
    %540 = vadd.xlane.f32.xlu0 %v538
    %v541 = vpop.xlane.xlu0 %540
    %542 = vadd.xlane.f32.xlu0 %v539
    %v543 = vpop.xlane.xlu0 %542
    %v544 = vmul.f32 %v541, %v533
    %v545 = vmul.f32 %v543, %v533
    %v546 = vadd.f32 %v544, 1e-05
    %v547 = vadd.f32 %v545, 1e-05
    %v548 = vrsqrt.pop %v546
    %v549 = vmul.f32 %v548, %v546
    %v550 = vmul.f32 %v549, %v548
    %v551 = vmul.f32 0.5, %v550
    %v552 = vsub.f32 1.5, %v551
    %v553 = vmul.f32 %v548, %v552
    %vm554 = vweird.f32 %v546
    %vm555 = vweird.f32 %v548
    %vm556 = vmor %vm554, %vm555
    %v557 = vsel %vm556, %v548, %v553
    %v558 = vrsqrt.pop %v547
    %v559 = vmul.f32 %v558, %v547
    %v560 = vmul.f32 %v559, %v558
    %v561 = vmul.f32 0.5, %v560
    %v562 = vsub.f32 1.5, %v561
    %v563 = vmul.f32 %v558, %v562
    %vm564 = vweird.f32 %v547
    %vm565 = vweird.f32 %v558
    %vm566 = vmor %vm564, %vm565
    %v567 = vsel %vm566, %v558, %v563
    %v568 = vmul.f32 %v536, %v557
    %v569 = vmul.f32 %v537, %v567
    %v570 = vperm.slane %v109, 1
    %v571 = vmul.f32 %v568, %v570
    %v572 = vmul.f32 %v569, %v570
    %v573 = vperm.slane %v109, 2
    %v574 = vadd.f32 %v571, %v573
    %v575 = vadd.f32 %v572, %v573
    %v576 = vmax.f32 %v574, 0.0
    %v577 = vmax.f32 %v575, 0.0
    %s578 = scalar_lea.vmem [#allocation7], 64
    %v579 = vld [vmem:[%s578] sm:$0xf]
    %v580 = vld [vmem:[%s578 + $0x4] sm:$0xf]
    %v581 = vld [vmem:[%s578 + $0x8] sm:$0xf]
    %v582 = vld [vmem:[%s578 + $0xc] sm:$0xf]
    %v583 = vld [vmem:[%s578 + $0x10] sm:$0xf]
    %v584 = vld [vmem:[%s578 + $0x14] sm:$0xf]
    %v585 = vld [vmem:[%s578 + $0x18] sm:$0xf]
    %v586 = vld [vmem:[%s578 + $0x1c] sm:$0xf]
    %v587 = vld [vmem:[%s578 + $0x20] sm:$0xf]
    %v588 = vld [vmem:[%s578 + $0x24] sm:$0xf]
    %v589 = vld [vmem:[%s578 + $0x28] sm:$0xf]
    %v590 = vld [vmem:[%s578 + $0x2c] sm:$0xf]
    %v591 = vld [vmem:[%s578 + $0x30] sm:$0xf]
    %v592 = vld [vmem:[%s578 + $0x34] sm:$0xf]
    %v593 = vld [vmem:[%s578 + $0x38] sm:$0xf]
    %v594 = vld [vmem:[%s578 + $0x3c] sm:$0xf]
    %v595 = vpack.c.bf16 %v577, %v576
    %v596 = vperm.slane %v109, 3
    %v613 = vunpack.c.l.b16 %v579
    %v614 = vunpack.c.l.b16 %v580
    %v615 = vunpack.c.l.b16 %v581
    %v616 = vunpack.c.l.b16 %v582
    %v617 = vunpack.c.l.b16 %v583
    %v618 = vunpack.c.l.b16 %v584
    %v619 = vunpack.c.l.b16 %v585
    %v620 = vunpack.c.l.b16 %v586
    %v621 = vunpack.c.l.b16 %v587
    %v622 = vunpack.c.l.b16 %v588
    %v623 = vunpack.c.l.b16 %v589
    %v624 = vunpack.c.l.b16 %v590
    %v625 = vunpack.c.l.b16 %v591
    %v626 = vunpack.c.l.b16 %v592
    %v627 = vunpack.c.l.b16 %v593
    %v628 = vunpack.c.l.b16 %v594
    %v629 = vpack.c.b16 %v614, %v613
    %v630 = vpack.c.b16 %v616, %v615
    %v631 = vpack.c.b16 %v618, %v617
    %v632 = vpack.c.b16 %v620, %v619
    %v633 = vpack.c.b16 %v622, %v621
    %v634 = vpack.c.b16 %v624, %v623
    %v635 = vpack.c.b16 %v626, %v625
    %v636 = vpack.c.b16 %v628, %v627
    %645 = vmatpush.bf16.msra.mxu0 %v636
    %646 = vmatpush.bf16.msra.mxu0 %v635
    %647 = vmatpush.bf16.msra.mxu0 %v634
    %648 = vmatpush.bf16.msra.mxu0 %v633
    %649 = vmatpush.bf16.msra.mxu0 %v632
    %650 = vmatpush.bf16.msra.mxu0 %v631
    %651 = vmatpush.bf16.msra.mxu0 %v630
    %652 = vmatpush.bf16.msra.mxu0 %v629
    %653 = vmatmul.bf16.gmra.mxu0 %v595
    %v654 = vpop.f32.mrf.mxu0
    %v655 = vadd.f32 %v596, %v654
    %v656 = vpop.f32.mrf.mxu0
    %v657 = vadd.f32 %v596, %v656
    %658 = vdwg.mxu0
    %v659 = vmul.f32 %v429, %v655
    %v660 = vmul.f32 %v430, %v657
    %v661 = vadd.f32 %v179, %v659
    %v662 = vadd.f32 %v180, %v660
    %s663 = scalar_lea.vmem [#allocation7], 128
    %v664 = vld [vmem:[%s663] sm:$0xf]
    %v665 = vld [vmem:[%s663 + $0x4] sm:$0xf]
    %v666 = vld [vmem:[%s663 + $0x8] sm:$0xf]
    %v667 = vld [vmem:[%s663 + $0xc] sm:$0xf]
    %v668 = vld [vmem:[%s663 + $0x10] sm:$0xf]
    %v669 = vld [vmem:[%s663 + $0x14] sm:$0xf]
    %v670 = vld [vmem:[%s663 + $0x18] sm:$0xf]
    %v671 = vld [vmem:[%s663 + $0x1c] sm:$0xf]
    %v672 = vld [vmem:[%s663 + $0x20] sm:$0xf]
    %v673 = vld [vmem:[%s663 + $0x24] sm:$0xf]
    %v674 = vld [vmem:[%s663 + $0x28] sm:$0xf]
    %v675 = vld [vmem:[%s663 + $0x2c] sm:$0xf]
    %v676 = vld [vmem:[%s663 + $0x30] sm:$0xf]
    %v677 = vld [vmem:[%s663 + $0x34] sm:$0xf]
    %v678 = vld [vmem:[%s663 + $0x38] sm:$0xf]
    %v679 = vld [vmem:[%s663 + $0x3c] sm:$0xf]
    %v680 = vpack.c.bf16 %v164, %v163
    %v681 = vperm.slane %v109, 4
    %v698 = vunpack.c.l.b16 %v664
    %v699 = vunpack.c.l.b16 %v665
    %v700 = vunpack.c.l.b16 %v666
    %v701 = vunpack.c.l.b16 %v667
    %v702 = vunpack.c.l.b16 %v668
    %v703 = vunpack.c.l.b16 %v669
    %v704 = vunpack.c.l.b16 %v670
    %v705 = vunpack.c.l.b16 %v671
    %v706 = vunpack.c.l.b16 %v672
    %v707 = vunpack.c.l.b16 %v673
    %v708 = vunpack.c.l.b16 %v674
    %v709 = vunpack.c.l.b16 %v675
    %v710 = vunpack.c.l.b16 %v676
    %v711 = vunpack.c.l.b16 %v677
    %v712 = vunpack.c.l.b16 %v678
    %v713 = vunpack.c.l.b16 %v679
    %v714 = vpack.c.b16 %v699, %v698
    %v715 = vpack.c.b16 %v701, %v700
    %v716 = vpack.c.b16 %v703, %v702
    %v717 = vpack.c.b16 %v705, %v704
    %v718 = vpack.c.b16 %v707, %v706
    %v719 = vpack.c.b16 %v709, %v708
    %v720 = vpack.c.b16 %v711, %v710
    %v721 = vpack.c.b16 %v713, %v712
    %730 = vmatpush.bf16.msra.mxu0 %v721
    %731 = vmatpush.bf16.msra.mxu0 %v720
    %732 = vmatpush.bf16.msra.mxu0 %v719
    %733 = vmatpush.bf16.msra.mxu0 %v718
    %734 = vmatpush.bf16.msra.mxu0 %v717
    %735 = vmatpush.bf16.msra.mxu0 %v716
    %736 = vmatpush.bf16.msra.mxu0 %v715
    %737 = vmatpush.bf16.msra.mxu0 %v714
    %738 = vmatmul.bf16.gmra.mxu0 %v680
    %v739 = vpop.f32.mrf.mxu0
    %v740 = vadd.f32 %v681, %v739
    %v741 = vpop.f32.mrf.mxu0
    %v742 = vadd.f32 %v681, %v741
    %743 = vdwg.mxu0
    %744 = vadd.xlane.f32.xlu0 %v740
    %v745 = vpop.xlane.xlu0 %744
    %746 = vadd.xlane.f32.xlu0 %v742
    %v747 = vpop.xlane.xlu0 %746
    %v748 = vmul.f32 %v745, %v533
    %v749 = vmul.f32 %v747, %v533
    %v750 = vsub.f32 %v740, %v748
    %v751 = vsub.f32 %v742, %v749
    %v752 = vmul.f32 %v750, %v750
    %v753 = vmul.f32 %v751, %v751
    %754 = vadd.xlane.f32.xlu0 %v752
    %v755 = vpop.xlane.xlu0 %754
    %756 = vadd.xlane.f32.xlu0 %v753
    %v757 = vpop.xlane.xlu0 %756
    %v758 = vmul.f32 %v755, %v533
    %v759 = vmul.f32 %v757, %v533
    %v760 = vadd.f32 %v758, 1e-05
    %v761 = vadd.f32 %v759, 1e-05
    %v762 = vrsqrt.pop %v760
    %v763 = vmul.f32 %v762, %v760
    %v764 = vmul.f32 %v763, %v762
    %v765 = vmul.f32 0.5, %v764
    %v766 = vsub.f32 1.5, %v765
    %v767 = vmul.f32 %v762, %v766
    %vm768 = vweird.f32 %v760
    %vm769 = vweird.f32 %v762
    %vm770 = vmor %vm768, %vm769
    %v771 = vsel %vm770, %v762, %v767
    %v772 = vrsqrt.pop %v761
    %v773 = vmul.f32 %v772, %v761
    %v774 = vmul.f32 %v773, %v772
    %v775 = vmul.f32 0.5, %v774
    %v776 = vsub.f32 1.5, %v775
    %v777 = vmul.f32 %v772, %v776
    %vm778 = vweird.f32 %v761
    %vm779 = vweird.f32 %v772
    %vm780 = vmor %vm778, %vm779
    %v781 = vsel %vm780, %v772, %v777
    %v782 = vmul.f32 %v750, %v771
    %v783 = vmul.f32 %v751, %v781
    %v784 = vperm.slane %v109, 5
    %v785 = vmul.f32 %v782, %v784
    %v786 = vmul.f32 %v783, %v784
    %v787 = vperm.slane %v109, 6
    %v788 = vadd.f32 %v785, %v787
    %v789 = vadd.f32 %v786, %v787
    %v790 = vmax.f32 %v788, 0.0
    %v791 = vmax.f32 %v789, 0.0
    %s792 = scalar_lea.vmem [#allocation7], 192
    %v793 = vld [vmem:[%s792] sm:$0xf]
    %v794 = vld [vmem:[%s792 + $0x4] sm:$0xf]
    %v795 = vld [vmem:[%s792 + $0x8] sm:$0xf]
    %v796 = vld [vmem:[%s792 + $0xc] sm:$0xf]
    %v797 = vld [vmem:[%s792 + $0x10] sm:$0xf]
    %v798 = vld [vmem:[%s792 + $0x14] sm:$0xf]
    %v799 = vld [vmem:[%s792 + $0x18] sm:$0xf]
    %v800 = vld [vmem:[%s792 + $0x1c] sm:$0xf]
    %v801 = vld [vmem:[%s792 + $0x20] sm:$0xf]
    %v802 = vld [vmem:[%s792 + $0x24] sm:$0xf]
    %v803 = vld [vmem:[%s792 + $0x28] sm:$0xf]
    %v804 = vld [vmem:[%s792 + $0x2c] sm:$0xf]
    %v805 = vld [vmem:[%s792 + $0x30] sm:$0xf]
    %v806 = vld [vmem:[%s792 + $0x34] sm:$0xf]
    %v807 = vld [vmem:[%s792 + $0x38] sm:$0xf]
    %v808 = vld [vmem:[%s792 + $0x3c] sm:$0xf]
    %v809 = vpack.c.bf16 %v791, %v790
    %v810 = vperm.slane %v109, 7
    %v827 = vunpack.c.l.b16 %v793
    %v828 = vunpack.c.l.b16 %v794
    %v829 = vunpack.c.l.b16 %v795
    %v830 = vunpack.c.l.b16 %v796
    %v831 = vunpack.c.l.b16 %v797
    %v832 = vunpack.c.l.b16 %v798
    %v833 = vunpack.c.l.b16 %v799
    %v834 = vunpack.c.l.b16 %v800
    %v835 = vunpack.c.l.b16 %v801
    %v836 = vunpack.c.l.b16 %v802
    %v837 = vunpack.c.l.b16 %v803
    %v838 = vunpack.c.l.b16 %v804
    %v839 = vunpack.c.l.b16 %v805
    %v840 = vunpack.c.l.b16 %v806
    %v841 = vunpack.c.l.b16 %v807
    %v842 = vunpack.c.l.b16 %v808
    %v843 = vpack.c.b16 %v828, %v827
    %v844 = vpack.c.b16 %v830, %v829
    %v845 = vpack.c.b16 %v832, %v831
    %v846 = vpack.c.b16 %v834, %v833
    %v847 = vpack.c.b16 %v836, %v835
    %v848 = vpack.c.b16 %v838, %v837
    %v849 = vpack.c.b16 %v840, %v839
    %v850 = vpack.c.b16 %v842, %v841
    %859 = vmatpush.bf16.msra.mxu0 %v850
    %860 = vmatpush.bf16.msra.mxu0 %v849
    %861 = vmatpush.bf16.msra.mxu0 %v848
    %862 = vmatpush.bf16.msra.mxu0 %v847
    %863 = vmatpush.bf16.msra.mxu0 %v846
    %864 = vmatpush.bf16.msra.mxu0 %v845
    %865 = vmatpush.bf16.msra.mxu0 %v844
    %866 = vmatpush.bf16.msra.mxu0 %v843
    %867 = vmatmul.bf16.gmra.mxu0 %v809
    %v868 = vpop.f32.mrf.mxu0
    %v869 = vadd.f32 %v810, %v868
    %v870 = vpop.f32.mrf.mxu0
    %v871 = vadd.f32 %v810, %v870
    %872 = vdwg.mxu0
    %v873 = vmul.f32 %v441, %v869
    %v874 = vmul.f32 %v442, %v871
    %v875 = vadd.f32 %v163, %v873
    %v876 = vadd.f32 %v164, %v874
    %vm877 = vcmp.gt.f32.partialorder %v429, 0.3
    %vm878 = vcmp.gt.f32.partialorder %v430, 0.3
    %v879 = vsel %vm877, %v661, %v179
    %v880 = vsel %vm878, %v662, %v180
    %vm881 = vcmp.gt.f32.partialorder %v441, 0.3
    %vm882 = vcmp.gt.f32.partialorder %v442, 0.3
    %v883 = vsel %vm881, %v875, %v163
    %v884 = vsel %vm882, %v876, %v164
    %s885 = scalar_lea.vmem [#allocation7], 256
    %v886 = vld [vmem:[%s885] sm:$0xf]
    %v887 = vld [vmem:[%s885 + $0x4] sm:$0xf]
    %v888 = vld [vmem:[%s885 + $0x8] sm:$0xf]
    %v889 = vld [vmem:[%s885 + $0xc] sm:$0xf]
    %v890 = vld [vmem:[%s885 + $0x10] sm:$0xf]
    %v891 = vld [vmem:[%s885 + $0x14] sm:$0xf]
    %v892 = vld [vmem:[%s885 + $0x18] sm:$0xf]
    %v893 = vld [vmem:[%s885 + $0x1c] sm:$0xf]
    %v894 = vld [vmem:[%s885 + $0x20] sm:$0xf]
    %v895 = vld [vmem:[%s885 + $0x24] sm:$0xf]
    %v896 = vld [vmem:[%s885 + $0x28] sm:$0xf]
    %v897 = vld [vmem:[%s885 + $0x2c] sm:$0xf]
    %v898 = vld [vmem:[%s885 + $0x30] sm:$0xf]
    %v899 = vld [vmem:[%s885 + $0x34] sm:$0xf]
    %v900 = vld [vmem:[%s885 + $0x38] sm:$0xf]
    %v901 = vld [vmem:[%s885 + $0x3c] sm:$0xf]
    %v902 = vpack.c.bf16 %v884, %v883
    %v903 = vperm.slane %v110, 0
    %v920 = vunpack.c.l.b16 %v886
    %v921 = vunpack.c.l.b16 %v887
    %v922 = vunpack.c.l.b16 %v888
    %v923 = vunpack.c.l.b16 %v889
    %v924 = vunpack.c.l.b16 %v890
    %v925 = vunpack.c.l.b16 %v891
    %v926 = vunpack.c.l.b16 %v892
    %v927 = vunpack.c.l.b16 %v893
    %v928 = vunpack.c.l.b16 %v894
    %v929 = vunpack.c.l.b16 %v895
    %v930 = vunpack.c.l.b16 %v896
    %v931 = vunpack.c.l.b16 %v897
    %v932 = vunpack.c.l.b16 %v898
    %v933 = vunpack.c.l.b16 %v899
    %v934 = vunpack.c.l.b16 %v900
    %v935 = vunpack.c.l.b16 %v901
    %v936 = vpack.c.b16 %v921, %v920
    %v937 = vpack.c.b16 %v923, %v922
    %v938 = vpack.c.b16 %v925, %v924
    %v939 = vpack.c.b16 %v927, %v926
    %v940 = vpack.c.b16 %v929, %v928
    %v941 = vpack.c.b16 %v931, %v930
    %v942 = vpack.c.b16 %v933, %v932
    %v943 = vpack.c.b16 %v935, %v934
    %952 = vmatpush.bf16.msra.mxu0 %v943
    %953 = vmatpush.bf16.msra.mxu0 %v942
    %954 = vmatpush.bf16.msra.mxu0 %v941
    %955 = vmatpush.bf16.msra.mxu0 %v940
    %956 = vmatpush.bf16.msra.mxu0 %v939
    %957 = vmatpush.bf16.msra.mxu0 %v938
    %958 = vmatpush.bf16.msra.mxu0 %v937
    %959 = vmatpush.bf16.msra.mxu0 %v936
    %960 = vmatmul.bf16.gmra.mxu0 %v902
    %v961 = vpop.f32.mrf.mxu0
    %v962 = vadd.f32 %v903, %v961
    %v963 = vpop.f32.mrf.mxu0
    %v964 = vadd.f32 %v903, %v963
    %965 = vdwg.mxu0
    %s966 = scalar_lea.vmem [#allocation7], 320
    %v967 = vld [vmem:[%s966] sm:$0xf]
    %v968 = vld [vmem:[%s966 + $0x4] sm:$0xf]
    %v969 = vld [vmem:[%s966 + $0x8] sm:$0xf]
    %v970 = vld [vmem:[%s966 + $0xc] sm:$0xf]
    %v971 = vld [vmem:[%s966 + $0x10] sm:$0xf]
    %v972 = vld [vmem:[%s966 + $0x14] sm:$0xf]
    %v973 = vld [vmem:[%s966 + $0x18] sm:$0xf]
    %v974 = vld [vmem:[%s966 + $0x1c] sm:$0xf]
    %v975 = vld [vmem:[%s966 + $0x20] sm:$0xf]
    %v976 = vld [vmem:[%s966 + $0x24] sm:$0xf]
    %v977 = vld [vmem:[%s966 + $0x28] sm:$0xf]
    %v978 = vld [vmem:[%s966 + $0x2c] sm:$0xf]
    %v979 = vld [vmem:[%s966 + $0x30] sm:$0xf]
    %v980 = vld [vmem:[%s966 + $0x34] sm:$0xf]
    %v981 = vld [vmem:[%s966 + $0x38] sm:$0xf]
    %v982 = vld [vmem:[%s966 + $0x3c] sm:$0xf]
    %v983 = vpack.c.bf16 %v964, %v962
    %v984 = vperm.slane %v110, 1
    %v1001 = vunpack.c.l.b16 %v967
    %v1002 = vunpack.c.l.b16 %v968
    %v1003 = vunpack.c.l.b16 %v969
    %v1004 = vunpack.c.l.b16 %v970
    %v1005 = vunpack.c.l.b16 %v971
    %v1006 = vunpack.c.l.b16 %v972
    %v1007 = vunpack.c.l.b16 %v973
    %v1008 = vunpack.c.l.b16 %v974
    %v1009 = vunpack.c.l.b16 %v975
    %v1010 = vunpack.c.l.b16 %v976
    %v1011 = vunpack.c.l.b16 %v977
    %v1012 = vunpack.c.l.b16 %v978
    %v1013 = vunpack.c.l.b16 %v979
    %v1014 = vunpack.c.l.b16 %v980
    %v1015 = vunpack.c.l.b16 %v981
    %v1016 = vunpack.c.l.b16 %v982
    %v1017 = vpack.c.b16 %v1002, %v1001
    %v1018 = vpack.c.b16 %v1004, %v1003
    %v1019 = vpack.c.b16 %v1006, %v1005
    %v1020 = vpack.c.b16 %v1008, %v1007
    %v1021 = vpack.c.b16 %v1010, %v1009
    %v1022 = vpack.c.b16 %v1012, %v1011
    %v1023 = vpack.c.b16 %v1014, %v1013
    %v1024 = vpack.c.b16 %v1016, %v1015
    %1033 = vmatpush.bf16.msra.mxu0 %v1024
    %1034 = vmatpush.bf16.msra.mxu0 %v1023
    %1035 = vmatpush.bf16.msra.mxu0 %v1022
    %1036 = vmatpush.bf16.msra.mxu0 %v1021
    %1037 = vmatpush.bf16.msra.mxu0 %v1020
    %1038 = vmatpush.bf16.msra.mxu0 %v1019
    %1039 = vmatpush.bf16.msra.mxu0 %v1018
    %1040 = vmatpush.bf16.msra.mxu0 %v1017
    %1041 = vmatmul.bf16.gmra.mxu0 %v983
    %v1042 = vpop.f32.mrf.mxu0
    %v1043 = vadd.f32 %v984, %v1042
    %v1044 = vpop.f32.mrf.mxu0
    %v1045 = vadd.f32 %v984, %v1044
    %1046 = vdwg.mxu0
    %v1047 = vpack.c.bf16 %v880, %v879
    %1048 = vmatpush.bf16.msra.mxu0 %v943
    %1049 = vmatpush.bf16.msra.mxu0 %v942
    %1050 = vmatpush.bf16.msra.mxu0 %v941
    %1051 = vmatpush.bf16.msra.mxu0 %v940
    %1052 = vmatpush.bf16.msra.mxu0 %v939
    %1053 = vmatpush.bf16.msra.mxu0 %v938
    %1054 = vmatpush.bf16.msra.mxu0 %v937
    %1055 = vmatpush.bf16.msra.mxu0 %v936
    %1056 = vmatmul.bf16.gmra.mxu0 %v1047
    %v1057 = vpop.f32.mrf.mxu0
    %v1058 = vadd.f32 %v903, %v1057
    %v1059 = vpop.f32.mrf.mxu0
    %v1060 = vadd.f32 %v903, %v1059
    %1061 = vdwg.mxu0
    %v1062 = vpack.c.bf16 %v1060, %v1058
    %1063 = vmatpush.bf16.msra.mxu0 %v1024
    %1064 = vmatpush.bf16.msra.mxu0 %v1023
    %1065 = vmatpush.bf16.msra.mxu0 %v1022
    %1066 = vmatpush.bf16.msra.mxu0 %v1021
    %1067 = vmatpush.bf16.msra.mxu0 %v1020
    %1068 = vmatpush.bf16.msra.mxu0 %v1019
    %1069 = vmatpush.bf16.msra.mxu0 %v1018
    %1070 = vmatpush.bf16.msra.mxu0 %v1017
    %1071 = vmatmul.bf16.gmra.mxu0 %v1062
    %v1072 = vpop.f32.mrf.mxu0
    %v1073 = vadd.f32 %v984, %v1072
    %v1074 = vpop.f32.mrf.mxu0
    %v1075 = vadd.f32 %v984, %v1074
    %1076 = vdwg.mxu0
    %vm1077 = vcmp.gt.f32.partialorder %v135, 0.5
    %vm1078 = vcmp.gt.f32.partialorder %v139, 0.5
    %v1079 = vsub.f32 1.0, %v135
    %v1080 = vsub.f32 1.0, %v139
    %v1081 = vmul.f32 %v135, %v1043
    %v1082 = vmul.f32 %v139, %v1045
    %v1083 = vmul.f32 %v1079, %v879
    %v1084 = vmul.f32 %v1080, %v880
    %v1085 = vadd.f32 %v1081, %v1083
    %v1086 = vadd.f32 %v1082, %v1084
    %v1087 = vsel %vm1077, %v1085, %v879
    %v1088 = vsel %vm1078, %v1086, %v880
    %v1089 = vmul.f32 %v135, %v1073
    %v1090 = vmul.f32 %v139, %v1075
    %v1091 = vmul.f32 %v1079, %v883
    %v1092 = vmul.f32 %v1080, %v884
    %v1093 = vadd.f32 %v1089, %v1091
    %v1094 = vadd.f32 %v1090, %v1092
    %v1095 = vsel %vm1077, %v1093, %v883
    %v1096 = vsel %vm1078, %v1094, %v884
    %v1097 = vmul.f32 %v318, 0.6
    %v1098 = vmul.f32 %v333, 0.6
    %v1099 = vmul.f32 %v403, 0.4
    %v1100 = vmul.f32 %v418, 0.4
    %v1101 = vadd.f32 %v1097, %v1099
    %v1102 = vadd.f32 %v1098, %v1100
    %1104 = vset.pattern.permute.xlu0 0
    %1105 = vperm.xlu0 %1104, %v1101
    %v1106 = vpop.permute.xlu0 %1105
    %1109 = vset.pattern.permute.xlu0 0
    %1110 = vperm.xlu0 %1109, %v1102
    %v1111 = vpop.permute.xlu0 %1110
    %v1113 = vmul.f32 %v1106, %v1087
    %v1114 = vmul.f32 %v1111, %v1088
    %1115 = vset.pattern.permute.xlu0 1
    %1116 = vperm.xlu0 %1115, %v1101
    %v1117 = vpop.permute.xlu0 %1116
    %1119 = vset.pattern.permute.xlu0 1
    %1120 = vperm.xlu0 %1119, %v1102
    %v1121 = vpop.permute.xlu0 %1120
    %v1123 = vmul.f32 %v1117, %v1095
    %v1124 = vmul.f32 %v1121, %v1096
    %s1125 = scalar_lea.vmem [#allocation7], 384
    %v1126 = vld [vmem:[%s1125] sm:$0xf]
    %v1127 = vld [vmem:[%s1125 + $0x4] sm:$0xf]
    %v1128 = vld [vmem:[%s1125 + $0x8] sm:$0xf]
    %v1129 = vld [vmem:[%s1125 + $0xc] sm:$0xf]
    %v1130 = vld [vmem:[%s1125 + $0x10] sm:$0xf]
    %v1131 = vld [vmem:[%s1125 + $0x14] sm:$0xf]
    %v1132 = vld [vmem:[%s1125 + $0x18] sm:$0xf]
    %v1133 = vld [vmem:[%s1125 + $0x1c] sm:$0xf]
    %v1134 = vld [vmem:[%s1125 + $0x20] sm:$0xf]
    %v1135 = vld [vmem:[%s1125 + $0x24] sm:$0xf]
    %v1136 = vld [vmem:[%s1125 + $0x28] sm:$0xf]
    %v1137 = vld [vmem:[%s1125 + $0x2c] sm:$0xf]
    %v1138 = vld [vmem:[%s1125 + $0x30] sm:$0xf]
    %v1139 = vld [vmem:[%s1125 + $0x34] sm:$0xf]
    %v1140 = vld [vmem:[%s1125 + $0x38] sm:$0xf]
    %v1141 = vld [vmem:[%s1125 + $0x3c] sm:$0xf]
    %v1142 = vpack.c.bf16 %v1114, %v1113
    %s1143 = scalar_lea.vmem [#allocation7], 448
    %v1144 = vld [vmem:[%s1143] sm:$0xf]
    %v1145 = vld [vmem:[%s1143 + $0x4] sm:$0xf]
    %v1146 = vld [vmem:[%s1143 + $0x8] sm:$0xf]
    %v1147 = vld [vmem:[%s1143 + $0xc] sm:$0xf]
    %v1148 = vld [vmem:[%s1143 + $0x10] sm:$0xf]
    %v1149 = vld [vmem:[%s1143 + $0x14] sm:$0xf]
    %v1150 = vld [vmem:[%s1143 + $0x18] sm:$0xf]
    %v1151 = vld [vmem:[%s1143 + $0x1c] sm:$0xf]
    %v1152 = vld [vmem:[%s1143 + $0x20] sm:$0xf]
    %v1153 = vld [vmem:[%s1143 + $0x24] sm:$0xf]
    %v1154 = vld [vmem:[%s1143 + $0x28] sm:$0xf]
    %v1155 = vld [vmem:[%s1143 + $0x2c] sm:$0xf]
    %v1156 = vld [vmem:[%s1143 + $0x30] sm:$0xf]
    %v1157 = vld [vmem:[%s1143 + $0x34] sm:$0xf]
    %v1158 = vld [vmem:[%s1143 + $0x38] sm:$0xf]
    %v1159 = vld [vmem:[%s1143 + $0x3c] sm:$0xf]
    %v1160 = vpack.c.bf16 %v1124, %v1123
    %v1177 = vunpack.c.l.b16 %v1144
    %v1178 = vunpack.c.l.b16 %v1145
    %v1179 = vunpack.c.l.b16 %v1146
    %v1180 = vunpack.c.l.b16 %v1147
    %v1181 = vunpack.c.l.b16 %v1148
    %v1182 = vunpack.c.l.b16 %v1149
    %v1183 = vunpack.c.l.b16 %v1150
    %v1184 = vunpack.c.l.b16 %v1151
    %v1185 = vunpack.c.l.b16 %v1152
    %v1186 = vunpack.c.l.b16 %v1153
    %v1187 = vunpack.c.l.b16 %v1154
    %v1188 = vunpack.c.l.b16 %v1155
    %v1189 = vunpack.c.l.b16 %v1156
    %v1190 = vunpack.c.l.b16 %v1157
    %v1191 = vunpack.c.l.b16 %v1158
    %v1192 = vunpack.c.l.b16 %v1159
    %v1193 = vpack.c.b16 %v1178, %v1177
    %v1194 = vpack.c.b16 %v1180, %v1179
    %v1195 = vpack.c.b16 %v1182, %v1181
    %v1196 = vpack.c.b16 %v1184, %v1183
    %v1197 = vpack.c.b16 %v1186, %v1185
    %v1198 = vpack.c.b16 %v1188, %v1187
    %v1199 = vpack.c.b16 %v1190, %v1189
    %v1200 = vpack.c.b16 %v1192, %v1191
    %1209 = vmatpush.bf16.msra.mxu0 %v1200
    %1210 = vmatpush.bf16.msra.mxu0 %v1199
    %1211 = vmatpush.bf16.msra.mxu0 %v1198
    %1212 = vmatpush.bf16.msra.mxu0 %v1197
    %1213 = vmatpush.bf16.msra.mxu0 %v1196
    %1214 = vmatpush.bf16.msra.mxu0 %v1195
    %1215 = vmatpush.bf16.msra.mxu0 %v1194
    %1216 = vmatpush.bf16.msra.mxu0 %v1193
    %1217 = vmatmul.bf16.gmra.mxu0 %v1160
    %v1218 = vpop.f32.mrf.mxu0
    %v1219 = vadd.f32 0.0, %v1218
    %v1220 = vpop.f32.mrf.mxu0
    %v1221 = vadd.f32 0.0, %v1220
    %1222 = vdwg.mxu0
    %v1239 = vunpack.c.l.b16 %v1126
    %v1240 = vunpack.c.l.b16 %v1127
    %v1241 = vunpack.c.l.b16 %v1128
    %v1242 = vunpack.c.l.b16 %v1129
    %v1243 = vunpack.c.l.b16 %v1130
    %v1244 = vunpack.c.l.b16 %v1131
    %v1245 = vunpack.c.l.b16 %v1132
    %v1246 = vunpack.c.l.b16 %v1133
    %v1247 = vunpack.c.l.b16 %v1134
    %v1248 = vunpack.c.l.b16 %v1135
    %v1249 = vunpack.c.l.b16 %v1136
    %v1250 = vunpack.c.l.b16 %v1137
    %v1251 = vunpack.c.l.b16 %v1138
    %v1252 = vunpack.c.l.b16 %v1139
    %v1253 = vunpack.c.l.b16 %v1140
    %v1254 = vunpack.c.l.b16 %v1141
    %v1255 = vpack.c.b16 %v1240, %v1239
    %v1256 = vpack.c.b16 %v1242, %v1241
    %v1257 = vpack.c.b16 %v1244, %v1243
    %v1258 = vpack.c.b16 %v1246, %v1245
    %v1259 = vpack.c.b16 %v1248, %v1247
    %v1260 = vpack.c.b16 %v1250, %v1249
    %v1261 = vpack.c.b16 %v1252, %v1251
    %v1262 = vpack.c.b16 %v1254, %v1253
    %1271 = vmatpush.bf16.msra.mxu0 %v1262
    %1272 = vmatpush.bf16.msra.mxu0 %v1261
    %1273 = vmatpush.bf16.msra.mxu0 %v1260
    %1274 = vmatpush.bf16.msra.mxu0 %v1259
    %1275 = vmatpush.bf16.msra.mxu0 %v1258
    %1276 = vmatpush.bf16.msra.mxu0 %v1257
    %1277 = vmatpush.bf16.msra.mxu0 %v1256
    %1278 = vmatpush.bf16.msra.mxu0 %v1255
    %1279 = vmatmul.bf16.gmra.mxu0 %v1142
    %v1280 = vpop.f32.mrf.mxu0
    %v1281 = vadd.f32 %v1219, %v1280
    %v1282 = vpop.f32.mrf.mxu0
    %v1283 = vadd.f32 %v1221, %v1282
    %1284 = vdwg.mxu0
    %v1285 = vperm.slane %v110, 2
    %v1286 = vadd.f32 %v1281, %v1285
    %v1287 = vadd.f32 %v1283, %v1285
    %v1288 = vmax.f32 %v1286, 0.0
    %v1289 = vmax.f32 %v1287, 0.0
    %s1290 = scalar_lea.vmem [#allocation7], 512
    %v1291 = vld [vmem:[%s1290] sm:$0xf]
    %v1292 = vld [vmem:[%s1290 + $0x4] sm:$0xf]
    %v1293 = vld [vmem:[%s1290 + $0x8] sm:$0xf]
    %v1294 = vld [vmem:[%s1290 + $0xc] sm:$0xf]
    %v1295 = vld [vmem:[%s1290 + $0x10] sm:$0xf]
    %v1296 = vld [vmem:[%s1290 + $0x14] sm:$0xf]
    %v1297 = vld [vmem:[%s1290 + $0x18] sm:$0xf]
    %v1298 = vld [vmem:[%s1290 + $0x1c] sm:$0xf]
    %v1299 = vld [vmem:[%s1290 + $0x20] sm:$0xf]
    %v1300 = vld [vmem:[%s1290 + $0x24] sm:$0xf]
    %v1301 = vld [vmem:[%s1290 + $0x28] sm:$0xf]
    %v1302 = vld [vmem:[%s1290 + $0x2c] sm:$0xf]
    %v1303 = vld [vmem:[%s1290 + $0x30] sm:$0xf]
    %v1304 = vld [vmem:[%s1290 + $0x34] sm:$0xf]
    %v1305 = vld [vmem:[%s1290 + $0x38] sm:$0xf]
    %v1306 = vld [vmem:[%s1290 + $0x3c] sm:$0xf]
    %v1307 = vpack.c.bf16 %v1289, %v1288
    %v1308 = vperm.slane %v110, 3
    %v1325 = vunpack.c.l.b16 %v1291
    %v1326 = vunpack.c.l.b16 %v1292
    %v1327 = vunpack.c.l.b16 %v1293
    %v1328 = vunpack.c.l.b16 %v1294
    %v1329 = vunpack.c.l.b16 %v1295
    %v1330 = vunpack.c.l.b16 %v1296
    %v1331 = vunpack.c.l.b16 %v1297
    %v1332 = vunpack.c.l.b16 %v1298
    %v1333 = vunpack.c.l.b16 %v1299
    %v1334 = vunpack.c.l.b16 %v1300
    %v1335 = vunpack.c.l.b16 %v1301
    %v1336 = vunpack.c.l.b16 %v1302
    %v1337 = vunpack.c.l.b16 %v1303
    %v1338 = vunpack.c.l.b16 %v1304
    %v1339 = vunpack.c.l.b16 %v1305
    %v1340 = vunpack.c.l.b16 %v1306
    %v1341 = vpack.c.b16 %v1326, %v1325
    %v1342 = vpack.c.b16 %v1328, %v1327
    %v1343 = vpack.c.b16 %v1330, %v1329
    %v1344 = vpack.c.b16 %v1332, %v1331
    %v1345 = vpack.c.b16 %v1334, %v1333
    %v1346 = vpack.c.b16 %v1336, %v1335
    %v1347 = vpack.c.b16 %v1338, %v1337
    %v1348 = vpack.c.b16 %v1340, %v1339
    %1357 = vmatpush.bf16.msra.mxu0 %v1348
    %1358 = vmatpush.bf16.msra.mxu0 %v1347
    %1359 = vmatpush.bf16.msra.mxu0 %v1346
    %1360 = vmatpush.bf16.msra.mxu0 %v1345
    %1361 = vmatpush.bf16.msra.mxu0 %v1344
    %1362 = vmatpush.bf16.msra.mxu0 %v1343
    %1363 = vmatpush.bf16.msra.mxu0 %v1342
    %1364 = vmatpush.bf16.msra.mxu0 %v1341
    %1365 = vmatmul.bf16.gmra.mxu0 %v1307
    %v1366 = vpop.f32.mrf.mxu0
    %v1367 = vadd.f32 %v1308, %v1366
    %v1368 = vpop.f32.mrf.mxu0
    %v1369 = vadd.f32 %v1308, %v1368
    %1370 = vdwg.mxu0
    %v1371 = vxor.u32 %v1367, 2147483648
    %v1372 = vxor.u32 %v1369, 2147483648
    %v1373 = vmul.f32 %v1371, 1.442695
    %v1374 = vpow.pop %v1373
    %v1375 = vmul.f32 %v1372, 1.442695
    %v1376 = vpow.pop %v1375
    %v1377 = vadd.f32 %v1374, 1.0
    %v1378 = vadd.f32 %v1376, 1.0
    %v1379 = vrcp.pop %v1377
    %v1380 = vmul.f32 %v1377, %v1379
    %v1381 = vsub.f32 1.0, %v1380
    %v1382 = vmul.f32 %v1379, %v1381
    %v1383 = vadd.f32 %v1379, %v1382
    %vm1384 = vweird.f32 %v1377
    %vm1385 = vweird.f32 %v1379
    %vm1386 = vmor %vm1384, %vm1385
    %v1387 = vsel %vm1386, %v1379, %v1383
    %v1388 = vand.u32 2147483647, %v1377
    %vm1389 = vcmp.eq.f32.partialorder %v1388, 8.507059e+37
    %v1390 = vand.u32 %v1377, 2147483648
    %v1391 = vor.u32 1.1754944e-38, %v1390
    %v1392 = vsel %vm1389, %v1391, %v1387
    %v1393 = vmul.f32 1.0, %v1392
    %v1394 = vrcp.pop %v1378
    %v1395 = vmul.f32 %v1378, %v1394
    %v1396 = vsub.f32 1.0, %v1395
    %v1397 = vmul.f32 %v1394, %v1396
    %v1398 = vadd.f32 %v1394, %v1397
    %vm1399 = vweird.f32 %v1378
    %vm1400 = vweird.f32 %v1394
    %vm1401 = vmor %vm1399, %vm1400
    %v1402 = vsel %vm1401, %v1394, %v1398
    %v1403 = vand.u32 2147483647, %v1378
    %vm1404 = vcmp.eq.f32.partialorder %v1403, 8.507059e+37
    %v1405 = vand.u32 %v1378, 2147483648
    %v1406 = vor.u32 1.1754944e-38, %v1405
    %v1407 = vsel %vm1404, %v1406, %v1402
    %v1408 = vmul.f32 1.0, %v1407
    %v1409 = vmul.f32 %v1393, %v1113
    %v1410 = vmul.f32 %v1408, %v1114
    %v1411 = vsub.f32 1.0, %v1393
    %v1412 = vsub.f32 1.0, %v1408
    %v1413 = vmul.f32 %v1411, %v1123
    %v1414 = vmul.f32 %v1412, %v1124
    %1415 = vst [vmem:[#allocation10] sm:$0xff] %v1409
    %1416 = vst [vmem:[#allocation10 + $0x10] sm:$0xff] %v1410
    %1417 = vst [vmem:[#allocation10 + $0x8] sm:$0xff] %v1413
    %1418 = vst [vmem:[#allocation10 + $0x18] sm:$0xff] %v1414
    // Predicated region
    $region58: #{tpu_custom_call.1} parent=1 // pred_check
      _
    $region59: #{tpu_custom_call.1} parent=1 // pred_check_branch
      %1420 = sbr.rel (0) target = $region61
    $region60: #{tpu_custom_call.1} parent=1 // pred_region
      %1422 = vsyncadd [#allocation4], 0
      %s1423 = sshll.u32 [#allocation10], 4
      %s1424 = int_to_ptr.vmem [resolvable:$true] %s1423
      %s1425 = sshll.u32 %s10, 4
      %s1426 = int_to_ptr.hbm [resolvable:$true] %s1425
      %1431 = dma.vmem_to_hbm [thread:$0]  %s1424, 512, %s1426, [#allocation4], 256, 256, 16
    $region61: #{tpu_custom_call.1} parent=1 // pred_fallthru
      _
    // Predicated region
    $region62: #{tpu_custom_call.1} parent=1 // pred_check
      _
    $region63: #{tpu_custom_call.1} parent=1 // pred_check_branch
      %1433 = sbr.rel (0) target = $region65
    $region64: #{tpu_custom_call.1} parent=1 // pred_region
      %1435 = dma.done [#allocation4], 512
    $region65: #{tpu_custom_call.1} parent=1 // pred_fallthru
      _
    %1436 = vsyncpa [#allocation3], 1
    %1437 = vsyncpa [#allocation6], 1
    %1438 = vsyncpa [#allocation9], 1
    %1439 = vsyncpa [#allocation4], 1

</llo_original>
